<compile_context>
chip_gen: v5e
topology: v5e:2x2
jax: 0.10.0
libtpu: 0.0.40
codegen_flags: <defaults>
</compile_context>

<pallas_src>
import functools
import math

import jax
import jax.numpy as jnp
from jax import lax
from jax.experimental import pallas as pl
from jax.experimental.pallas import tpu as pltpu

_NEG_INF = -1e30


def _reweight(option):
    if option == "none":
        return lambda iou: jnp.ones_like(iou)
    elif option == "linear":
        return lambda iou: iou
    elif option == "exp":
        return lambda iou: jnp.exp(iou) - 1.0
    else:
        raise ValueError(option)


def _round_up(x, m):
    return (x + m - 1) // m * m


def _supcon_kernel(fr_ref, fc_ref, lr_ref, lc_ref, iou_ref,
                   loss_ref, keep_ref,
                   m_scr, l_scr, sp_scr, den_scr, *,
                   inv_temp, iou_threshold, reweight_func,
                   block_m, block_n, m_real, m_padded):
    i = pl.program_id(0)
    j = pl.program_id(1)

    @pl.when(j == 0)
    def _init():
        m_scr[...] = jnp.full((block_m, 1), _NEG_INF, jnp.float32)
        l_scr[...] = jnp.zeros((block_m, 1), jnp.float32)
        sp_scr[...] = jnp.zeros((block_m, 1), jnp.float32)
        den_scr[...] = jnp.zeros((block_m, 1), jnp.float32)

    # Fold 1/temperature into the small [TM, K] operand (stays in the MXU
    # input dtype, e.g. bf16); contract over K of BOTH operands so the RHS is
    # consumed transposed natively (no in-VMEM transpose); accumulate in f32.
    f_rows = fr_ref[...] * inv_temp                          # [TM, K]
    sim = lax.dot_general(
        f_rows, fc_ref[...],
        dimension_numbers=(((1,), (1,)), ((), ())),
        preferred_element_type=jnp.float32)                  # [TM, TN] f32

    row0 = i * block_m
    col0 = j * block_n
    rows = lax.broadcasted_iota(jnp.int32, (block_m, block_n), 0) + row0
    cols = lax.broadcasted_iota(jnp.int32, (block_m, block_n), 1) + col0
    not_diag = rows != cols

    # Label mask via broadcast compare of the pre-oriented label vectors.
    label_match = lr_ref[...] == lc_ref[...]                 # [TM, TN] bool
    if m_real != m_padded:
        valid = cols < m_real                                # padded cols out
        label_match = jnp.logical_and(label_match, valid)
        lse_mask = jnp.logical_and(not_diag, valid)
    else:
        lse_mask = not_diag
    pos_mask = jnp.logical_and(label_match, not_diag)

    # den_i = label_mask.sum(1) in the torch code (includes the self-match).
    den_scr[...] += jnp.sum(label_match.astype(jnp.float32), axis=1,
                            keepdims=True)
    # Linear part of the numerator: raw positive similarities.
    sp_scr[...] += jnp.sum(jnp.where(pos_mask, sim, 0.0), axis=1,
                           keepdims=True)

    # Online masked logsumexp over the non-diagonal (and non-padded) columns.
    tile_max = jnp.max(jnp.where(lse_mask, sim, _NEG_INF), axis=1,
                       keepdims=True)
    m_new = jnp.maximum(m_scr[...], tile_max)
    p = jnp.where(lse_mask, jnp.exp(sim - m_new), 0.0)
    l_scr[...] = (l_scr[...] * jnp.exp(m_scr[...] - m_new)
                  + jnp.sum(p, axis=1, keepdims=True))
    m_scr[...] = m_new

    @pl.when(j == pl.num_programs(1) - 1)
    def _finalize():
        lse = m_scr[...] + jnp.log(l_scr[...])               # [TM, 1]
        den = den_scr[...]
        #   log_prob_ij = sim_ij - lse_i
        #   num_i = sum_pos(sim_ij) - (den_i - 1) * lse_i
        num = sp_scr[...] - (den - 1.0) * lse
        # Exact divide; den >= 1 for every real row (self-match). The max(.,1)
        # only protects fully-padded rows, whose keep is forced to 0 below.
        per = num / jnp.maximum(den, 1.0)

        ious = iou_ref[...]                                  # [TM, 1]
        keep = (ious >= iou_threshold).astype(jnp.float32)
        if m_real != m_padded:
            row_ids = (lax.broadcasted_iota(jnp.int32, (block_m, 1), 0) + row0)
            keep = jnp.where(row_ids < m_real, keep, 0.0)
        coef = _reweight(reweight_func)(ious)

        # TODO(synk): a lane-major (1, TM) output layout would save a few
        # masked stores per row tile but needs a narrow transpose; skipped.
        loss_ref[...] = -per * coef * keep
        keep_ref[...] = keep


def supcon_loss(features, labels, ious, *, temperature=0.2,
                iou_threshold=0.5, reweight_func="none",
                block_m=128, block_n=512, matmul_dtype=jnp.bfloat16):
    """Forward of FSCE SupConLoss. features [M, K], labels [M], ious [M].

    block_m / block_n should be multiples of 128; raise block_m to 256 on
    v6e/v7x for large M (256-wide MXU) — kept at 128 by default for v5e.
    """
    M, K = features.shape
    assert labels.shape[0] == M and ious.shape[0] == M

    m_aligned = _round_up(M, 128)
    block_m = max(128, min(block_m, m_aligned))
    block_n = max(128, min(block_n, m_aligned))
    m_padded = _round_up(M, math.lcm(block_m, block_n))
    pad = m_padded - M

    feats = features.astype(matmul_dtype)
    if pad:
        feats = jnp.pad(feats, ((0, pad), (0, 0)))
        labels = jnp.pad(labels, (0, pad))     # value irrelevant: cols masked
        ious = jnp.pad(ious, (0, pad))         # keep forced to 0 in-kernel

    labels_row = labels.reshape(m_padded, 1).astype(jnp.int32)
    labels_col = labels.reshape(1, m_padded).astype(jnp.int32)
    ious2d = ious.reshape(m_padded, 1).astype(jnp.float32)

    kernel = functools.partial(
        _supcon_kernel,
        inv_temp=1.0 / temperature,
        iou_threshold=iou_threshold,
        reweight_func=reweight_func,
        block_m=block_m,
        block_n=block_n,
        m_real=M,
        m_padded=m_padded,
    )

    loss_rows, keep_rows = pl.pallas_call(
        kernel,
        out_shape=(jax.ShapeDtypeStruct((m_padded, 1), jnp.float32),
                   jax.ShapeDtypeStruct((m_padded, 1), jnp.float32)),
        grid=(m_padded // block_m, m_padded // block_n),
        in_specs=[
            pl.BlockSpec((block_m, K), lambda i, j: (i, 0)),   # row features
            pl.BlockSpec((block_n, K), lambda i, j: (j, 0)),   # col features
            pl.BlockSpec((block_m, 1), lambda i, j: (i, 0)),   # labels (rows)
            pl.BlockSpec((1, block_n), lambda i, j: (0, j)),   # labels (lanes)
            pl.BlockSpec((block_m, 1), lambda i, j: (i, 0)),   # ious
        ],
        out_specs=(
            pl.BlockSpec((block_m, 1), lambda i, j: (i, 0)),
            pl.BlockSpec((block_m, 1), lambda i, j: (i, 0)),
        ),
        scratch_shapes=[
            pltpu.VMEM((block_m, 1), jnp.float32),   # running max
            pltpu.VMEM((block_m, 1), jnp.float32),   # running sum-exp
            pltpu.VMEM((block_m, 1), jnp.float32),   # running sum_pos(sim)
            pltpu.VMEM((block_m, 1), jnp.float32),   # running positive count
        ],
        compiler_params=pltpu.CompilerParams(
            dimension_semantics=("parallel", "arbitrary")),
    )(feats, feats, labels_row, labels_col, ious2d)

    # Masked mean == loss[keep].mean(); NaN if nothing passes the threshold,
    # matching the PyTorch behaviour. Padded rows contribute 0 to both sums.
    return jnp.sum(loss_rows) / jnp.sum(keep_rows)


def _supcon_loss_ref(features, labels, ious, *, temperature=0.2,
                     iou_threshold=0.5, reweight_func="none"):
    """Pure-JAX reference mirroring the PyTorch forward (for validation)."""
    labels = labels.reshape(-1, 1)
    label_mask = (labels == labels.T).astype(jnp.float32)
    sim = (features @ features.T) / temperature
    sim = sim - jnp.max(sim, axis=1, keepdims=True)
    M = features.shape[0]
    logits_mask = 1.0 - jnp.eye(M, dtype=jnp.float32)
    exp_sim = jnp.exp(sim) * logits_mask
    log_prob = sim - jnp.log(jnp.sum(exp_sim, axis=1, keepdims=True))
    per = jnp.sum(log_prob * logits_mask * label_mask, axis=1) / jnp.sum(
        label_mask, axis=1)
    keep = (ious >= iou_threshold).astype(jnp.float32)
    coef = _reweight(reweight_func)(ious)
    loss = -per * coef * keep
    return jnp.sum(loss) / jnp.sum(keep)


if __name__ == "__main__":
    key = jax.random.PRNGKey(0)
    k1, k2, k3 = jax.random.split(key, 3)

    M, K = 256, 32  # 256 proposals, 32-dim contrastive features
    features = jax.random.normal(k1, (M, K), dtype=jnp.float32)
    # L2-normalize, as is typical before cosine similarity.
    features = features / jnp.linalg.norm(features, axis=1, keepdims=True)
    labels = jax.random.randint(k2, (M,), 0, 4, dtype=jnp.int32)
    ious = jax.random.uniform(k3, (M,), dtype=jnp.float32)

    # bf16 MXU path on a 2x2 (row x column) tile grid: exercises the online
    # logsumexp accumulation, init and finalize phases.
    for rw in ("none", "linear", "exp"):
        out = supcon_loss(features, labels, ious, temperature=0.2,
                          iou_threshold=0.5, reweight_func=rw,
                          block_m=128, block_n=128)
        out = jax.block_until_ready(out)
        ref = _supcon_loss_ref(features, labels, ious, temperature=0.2,
                               iou_threshold=0.5, reweight_func=rw)
        assert jnp.allclose(out, ref, rtol=2e-2, atol=2e-2), (rw, out, ref)

    # f32 MXU path: tight tolerance (exact den divide, no approx reciprocal).
    out32 = supcon_loss(features, labels, ious, reweight_func="linear",
                        block_m=128, block_n=128, matmul_dtype=jnp.float32)
    out32 = jax.block_until_ready(out32)
    ref32 = _supcon_loss_ref(features, labels, ious, reweight_func="linear")
    assert jnp.allclose(out32, ref32, rtol=1e-4, atol=1e-4), (out32, ref32)

    # Non-multiple M exercises the padding path (padded cols/rows masked).
    Mo = 200
    outp = supcon_loss(features[:Mo], labels[:Mo], ious[:Mo],
                       reweight_func="none")
    outp = jax.block_until_ready(outp)
    refp = _supcon_loss_ref(features[:Mo], labels[:Mo], ious[:Mo],
                            reweight_func="none")
    assert jnp.allclose(outp, refp, rtol=2e-2, atol=2e-2), (outp, refp)

    print("KERNEL_OK")
</pallas_src>

<mosaic_0001>
module attributes {stable_mosaic.version = 11 : i64} {
  func.func @_supcon_kernel(%arg0: i32, %arg1: i32, %arg2: memref<128x32xbf16, #tpu.memory_space<vmem>>, %arg3: memref<128x32xbf16, #tpu.memory_space<vmem>>, %arg4: memref<128x1xi32, #tpu.memory_space<vmem>>, %arg5: memref<1x128xi32, #tpu.memory_space<vmem>>, %arg6: memref<128x1xf32, #tpu.memory_space<vmem>>, %arg7: memref<128x1xf32, #tpu.memory_space<vmem>>, %arg8: memref<128x1xf32, #tpu.memory_space<vmem>>, %arg9: memref<128x1xf32, #tpu.memory_space<vmem>>, %arg10: memref<128x1xf32, #tpu.memory_space<vmem>>, %arg11: memref<128x1xf32, #tpu.memory_space<vmem>>, %arg12: memref<128x1xf32, #tpu.memory_space<vmem>>) attributes {dimension_semantics = [#tpu.dimension_semantics<parallel>, #tpu.dimension_semantics<arbitrary>], iteration_bounds = array<i64: 2, 2>, scalar_prefetch = 0 : i64, scratch_operands = 4 : i64, tpu.core_type = #tpu.core_type<tc>, window_params = [{transform_indices = @transform_0, window_bounds = array<i64: 128, 32>}, {transform_indices = @transform_1, window_bounds = array<i64: 128, 32>}, {transform_indices = @transform_2, window_bounds = array<i64: 128, 1>}, {transform_indices = @transform_3, window_bounds = array<i64: 1, 128>}, {transform_indices = @transform_4, window_bounds = array<i64: 128, 1>}, {transform_indices = @transform_5, window_bounds = array<i64: 128, 1>}, {transform_indices = @transform_6, window_bounds = array<i64: 128, 1>}]} {
    %c0_i32 = arith.constant 0 : i32
    %0 = arith.cmpi eq, %arg1, %c0_i32 : i32
    %1 = arith.extui %0 : i1 to i32
    %c0_i32_0 = arith.constant 0 : i32
    %2 = arith.cmpi ne, %1, %c0_i32_0 : i32
    scf.if %2 {
      %cst_36 = arith.constant -1.000000e+30 : f32
      %61 = vector.broadcast %cst_36 : f32 to vector<128x1xf32>
      %c0_37 = arith.constant 0 : index
      %c0_38 = arith.constant 0 : index
      %62 = vector.load %arg9[%c0_37, %c0_38] : memref<128x1xf32, #tpu.memory_space<vmem>>, vector<128x1xf32>
      tpu.vector_store %arg9[%c0_37, %c0_38], %61 {strides = array<i32>} : memref<128x1xf32, #tpu.memory_space<vmem>>, vector<128x1xf32>,
      %cst_39 = arith.constant 0.000000e+00 : f32
      %63 = vector.broadcast %cst_39 : f32 to vector<128x1xf32>
      %c0_40 = arith.constant 0 : index
      %c0_41 = arith.constant 0 : index
      %64 = vector.load %arg10[%c0_40, %c0_41] : memref<128x1xf32, #tpu.memory_space<vmem>>, vector<128x1xf32>
      tpu.vector_store %arg10[%c0_40, %c0_41], %63 {strides = array<i32>} : memref<128x1xf32, #tpu.memory_space<vmem>>, vector<128x1xf32>,
      %cst_42 = arith.constant 0.000000e+00 : f32
      %65 = vector.broadcast %cst_42 : f32 to vector<128x1xf32>
      %c0_43 = arith.constant 0 : index
      %c0_44 = arith.constant 0 : index
      %66 = vector.load %arg11[%c0_43, %c0_44] : memref<128x1xf32, #tpu.memory_space<vmem>>, vector<128x1xf32>
      tpu.vector_store %arg11[%c0_43, %c0_44], %65 {strides = array<i32>} : memref<128x1xf32, #tpu.memory_space<vmem>>, vector<128x1xf32>,
      %cst_45 = arith.constant 0.000000e+00 : f32
      %67 = vector.broadcast %cst_45 : f32 to vector<128x1xf32>
      %c0_46 = arith.constant 0 : index
      %c0_47 = arith.constant 0 : index
      %68 = vector.load %arg12[%c0_46, %c0_47] : memref<128x1xf32, #tpu.memory_space<vmem>>, vector<128x1xf32>
      tpu.vector_store %arg12[%c0_46, %c0_47], %67 {strides = array<i32>} : memref<128x1xf32, #tpu.memory_space<vmem>>, vector<128x1xf32>,
    } else {
    }
    %c0 = arith.constant 0 : index
    %c0_1 = arith.constant 0 : index
    %3 = vector.load %arg2[%c0, %c0_1] : memref<128x32xbf16, #tpu.memory_space<vmem>>, vector<128x32xbf16>
    %cst = arith.constant 5.000000e+00 : bf16
    %4 = vector.broadcast %cst : bf16 to vector<128x32xbf16>
    %5 = arith.mulf %3, %4 : vector<128x32xbf16>
    %c0_2 = arith.constant 0 : index
    %c0_3 = arith.constant 0 : index
    %6 = vector.load %arg3[%c0_2, %c0_3] : memref<128x32xbf16, #tpu.memory_space<vmem>>, vector<128x32xbf16>
    %cst_4 = arith.constant dense<0.000000e+00> : vector<128x128xf32>
    %7 = tpu.matmul %5, %6, %cst_4 {dimension_numbers = #tpu.dot_dimension_numbers<[1], [1], [0], [0], [0, 0, 1, 0], [], []>} : vector<128x32xbf16>, vector<128x32xbf16>, vector<128x128xf32> -> vector<128x128xf32>
    %c128_i32 = arith.constant 128 : i32
    %8 = arith.muli %arg0, %c128_i32 : i32
    %c128_i32_5 = arith.constant 128 : i32
    %9 = arith.muli %arg1, %c128_i32_5 : i32
    %10 = tpu.iota {dimensions = array<i32: 0>} : vector<128x128xi32>
    %11 = vector.broadcast %8 : i32 to vector<128x128xi32>
    %12 = arith.addi %10, %11 : vector<128x128xi32>
    %13 = tpu.iota {dimensions = array<i32: 1>} : vector<128x128xi32>
    %14 = vector.broadcast %9 : i32 to vector<128x128xi32>
    %15 = arith.addi %13, %14 : vector<128x128xi32>
    %16 = arith.cmpi ne, %12, %15 : vector<128x128xi32>
    %c0_6 = arith.constant 0 : index
    %c0_7 = arith.constant 0 : index
    %17 = vector.load %arg4[%c0_6, %c0_7] : memref<128x1xi32, #tpu.memory_space<vmem>>, vector<128x1xi32>
    %c0_8 = arith.constant 0 : index
    %c0_9 = arith.constant 0 : index
    %18 = vector.load %arg5[%c0_8, %c0_9] : memref<1x128xi32, #tpu.memory_space<vmem>>, vector<1x128xi32>
    %19 = vector.broadcast %17 : vector<128x1xi32> to vector<128x128xi32>
    %20 = vector.broadcast %18 : vector<1x128xi32> to vector<128x128xi32>
    %21 = arith.cmpi eq, %19, %20 : vector<128x128xi32>
    %22 = arith.andi %21, %16 : vector<128x128xi1>
    %c0_10 = arith.constant 0 : index
    %c0_11 = arith.constant 0 : index
    %23 = vector.load %arg12[%c0_10, %c0_11] : memref<128x1xf32, #tpu.memory_space<vmem>>, vector<128x1xf32>
    %24 = arith.extui %21 : vector<128x128xi1> to vector<128x128xi32>
    %25 = arith.sitofp %24 : vector<128x128xi32> to vector<128x128xf32>
    %cst_12 = arith.constant dense<0.000000e+00> : vector<128xf32>
    %26 = vector.multi_reduction <add>, %25, %cst_12 [1] : vector<128x128xf32> to vector<128xf32>
    %27 = vector.shape_cast %26 : vector<128xf32> to vector<128x1xf32>
    %28 = arith.addf %23, %27 : vector<128x1xf32>
    %c0_13 = arith.constant 0 : index
    %c0_14 = arith.constant 0 : index
    %29 = vector.load %arg12[%c0_13, %c0_14] : memref<128x1xf32, #tpu.memory_space<vmem>>, vector<128x1xf32>
    tpu.vector_store %arg12[%c0_13, %c0_14], %28 {strides = array<i32>} : memref<128x1xf32, #tpu.memory_space<vmem>>, vector<128x1xf32>,
    %c0_15 = arith.constant 0 : index
    %c0_16 = arith.constant 0 : index
    %30 = vector.load %arg11[%c0_15, %c0_16] : memref<128x1xf32, #tpu.memory_space<vmem>>, vector<128x1xf32>
    %cst_17 = arith.constant 0.000000e+00 : f32
    %31 = vector.broadcast %cst_17 : f32 to vector<128x128xf32>
    %32 = arith.select %22, %7, %31 : vector<128x128xi1>, vector<128x128xf32>
    %cst_18 = arith.constant dense<0.000000e+00> : vector<128xf32>
    %33 = vector.multi_reduction <add>, %32, %cst_18 [1] : vector<128x128xf32> to vector<128xf32>
    %34 = vector.shape_cast %33 : vector<128xf32> to vector<128x1xf32>
    %35 = arith.addf %30, %34 : vector<128x1xf32>
    %c0_19 = arith.constant 0 : index
    %c0_20 = arith.constant 0 : index
    %36 = vector.load %arg11[%c0_19, %c0_20] : memref<128x1xf32, #tpu.memory_space<vmem>>, vector<128x1xf32>
    tpu.vector_store %arg11[%c0_19, %c0_20], %35 {strides = array<i32>} : memref<128x1xf32, #tpu.memory_space<vmem>>, vector<128x1xf32>,
    %cst_21 = arith.constant -1.000000e+30 : f32
    %37 = vector.broadcast %cst_21 : f32 to vector<128x128xf32>
    %38 = arith.select %16, %7, %37 : vector<128x128xi1>, vector<128x128xf32>
    %cst_22 = arith.constant dense<0xFF800000> : vector<128xf32>
    %39 = vector.multi_reduction <maximumf>, %38, %cst_22 [1] : vector<128x128xf32> to vector<128xf32>
    %40 = vector.shape_cast %39 : vector<128xf32> to vector<128x1xf32>
    %c0_23 = arith.constant 0 : index
    %c0_24 = arith.constant 0 : index
    %41 = vector.load %arg9[%c0_23, %c0_24] : memref<128x1xf32, #tpu.memory_space<vmem>>, vector<128x1xf32>
    %42 = arith.maximumf %41, %40 : vector<128x1xf32>
    %43 = vector.broadcast %42 : vector<128x1xf32> to vector<128x128xf32>
    %44 = arith.subf %7, %43 : vector<128x128xf32>
    %45 = math.exp %44 : vector<128x128xf32>
    %cst_25 = arith.constant 0.000000e+00 : f32
    %46 = vector.broadcast %cst_25 : f32 to vector<128x128xf32>
    %47 = arith.select %16, %45, %46 : vector<128x128xi1>, vector<128x128xf32>
    %c0_26 = arith.constant 0 : index
    %c0_27 = arith.constant 0 : index
    %48 = vector.load %arg10[%c0_26, %c0_27] : memref<128x1xf32, #tpu.memory_space<vmem>>, vector<128x1xf32>
    %c0_28 = arith.constant 0 : index
    %c0_29 = arith.constant 0 : index
    %49 = vector.load %arg9[%c0_28, %c0_29] : memref<128x1xf32, #tpu.memory_space<vmem>>, vector<128x1xf32>
    %50 = arith.subf %49, %42 : vector<128x1xf32>
    %51 = math.exp %50 : vector<128x1xf32>
    %52 = arith.mulf %48, %51 : vector<128x1xf32>
    %cst_30 = arith.constant dense<0.000000e+00> : vector<128xf32>
    %53 = vector.multi_reduction <add>, %47, %cst_30 [1] : vector<128x128xf32> to vector<128xf32>
    %54 = vector.shape_cast %53 : vector<128xf32> to vector<128x1xf32>
    %55 = arith.addf %52, %54 : vector<128x1xf32>
    %c0_31 = arith.constant 0 : index
    %c0_32 = arith.constant 0 : index
    %56 = vector.load %arg10[%c0_31, %c0_32] : memref<128x1xf32, #tpu.memory_space<vmem>>, vector<128x1xf32>
    tpu.vector_store %arg10[%c0_31, %c0_32], %55 {strides = array<i32>} : memref<128x1xf32, #tpu.memory_space<vmem>>, vector<128x1xf32>,
    %c0_33 = arith.constant 0 : index
    %c0_34 = arith.constant 0 : index
    %57 = vector.load %arg9[%c0_33, %c0_34] : memref<128x1xf32, #tpu.memory_space<vmem>>, vector<128x1xf32>
    tpu.vector_store %arg9[%c0_33, %c0_34], %42 {strides = array<i32>} : memref<128x1xf32, #tpu.memory_space<vmem>>, vector<128x1xf32>,
    %c1_i32 = arith.constant 1 : i32
    %58 = arith.cmpi eq, %arg1, %c1_i32 : i32
    %59 = arith.extui %58 : i1 to i32
    %c0_i32_35 = arith.constant 0 : i32
    %60 = arith.cmpi ne, %59, %c0_i32_35 : i32
    scf.if %60 {
      %c0_36 = arith.constant 0 : index
      %c0_37 = arith.constant 0 : index
      %61 = vector.load %arg9[%c0_36, %c0_37] : memref<128x1xf32, #tpu.memory_space<vmem>>, vector<128x1xf32>
      %c0_38 = arith.constant 0 : index
      %c0_39 = arith.constant 0 : index
      %62 = vector.load %arg10[%c0_38, %c0_39] : memref<128x1xf32, #tpu.memory_space<vmem>>, vector<128x1xf32>
      %63 = math.log %62 : vector<128x1xf32>
      %64 = arith.addf %61, %63 : vector<128x1xf32>
      %c0_40 = arith.constant 0 : index
      %c0_41 = arith.constant 0 : index
      %65 = vector.load %arg12[%c0_40, %c0_41] : memref<128x1xf32, #tpu.memory_space<vmem>>, vector<128x1xf32>
      %c0_42 = arith.constant 0 : index
      %c0_43 = arith.constant 0 : index
      %66 = vector.load %arg11[%c0_42, %c0_43] : memref<128x1xf32, #tpu.memory_space<vmem>>, vector<128x1xf32>
      %cst_44 = arith.constant 1.000000e+00 : f32
      %67 = vector.broadcast %cst_44 : f32 to vector<128x1xf32>
      %68 = arith.subf %65, %67 : vector<128x1xf32>
      %69 = arith.mulf %68, %64 : vector<128x1xf32>
      %70 = arith.subf %66, %69 : vector<128x1xf32>
      %cst_45 = arith.constant 1.000000e+00 : f32
      %71 = vector.broadcast %cst_45 : f32 to vector<128x1xf32>
      %72 = arith.maximumf %65, %71 : vector<128x1xf32>
      %73 = arith.divf %70, %72 : vector<128x1xf32>
      %c0_46 = arith.constant 0 : index
      %c0_47 = arith.constant 0 : index
      %74 = vector.load %arg6[%c0_46, %c0_47] : memref<128x1xf32, #tpu.memory_space<vmem>>, vector<128x1xf32>
      %cst_48 = arith.constant 5.000000e-01 : f32
      %75 = vector.broadcast %cst_48 : f32 to vector<128x1xf32>
      %76 = arith.cmpf oge, %74, %75 : vector<128x1xf32>
      %77 = arith.extui %76 : vector<128x1xi1> to vector<128x1xi32>
      %78 = arith.sitofp %77 : vector<128x1xi32> to vector<128x1xf32>
      %cst_49 = arith.constant 1.000000e+00 : f32
      %79 = vector.broadcast %cst_49 : f32 to vector<128x1xf32>
      %cst_50 = arith.constant 0.000000e+00 : f32
      %80 = vector.broadcast %cst_50 : f32 to vector<128x1xf32>
      %81 = arith.subf %80, %73 : vector<128x1xf32>
      %82 = arith.mulf %81, %79 : vector<128x1xf32>
      %83 = arith.mulf %82, %78 : vector<128x1xf32>
      %c0_51 = arith.constant 0 : index
      %c0_52 = arith.constant 0 : index
      %84 = vector.load %arg7[%c0_51, %c0_52] : memref<128x1xf32, #tpu.memory_space<vmem>>, vector<128x1xf32>
      tpu.vector_store %arg7[%c0_51, %c0_52], %83 {strides = array<i32>} : memref<128x1xf32, #tpu.memory_space<vmem>>, vector<128x1xf32>,
      %c0_53 = arith.constant 0 : index
      %c0_54 = arith.constant 0 : index
      %85 = vector.load %arg8[%c0_53, %c0_54] : memref<128x1xf32, #tpu.memory_space<vmem>>, vector<128x1xf32>
      tpu.vector_store %arg8[%c0_53, %c0_54], %78 {strides = array<i32>} : memref<128x1xf32, #tpu.memory_space<vmem>>, vector<128x1xf32>,
    } else {
    }
    return
  }
  func.func @transform_0(%arg0: i32, %arg1: i32) -> (i32, i32) {
    %c0_i32 = arith.constant 0 : i32
    %c0_i32_0 = arith.constant 0 : i32
    return %arg0, %c0_i32 : i32, i32
  }
  func.func @transform_1(%arg0: i32, %arg1: i32) -> (i32, i32) {
    %c0_i32 = arith.constant 0 : i32
    %c0_i32_0 = arith.constant 0 : i32
    return %arg1, %c0_i32 : i32, i32
  }
  func.func @transform_2(%arg0: i32, %arg1: i32) -> (i32, i32) {
    %c0_i32 = arith.constant 0 : i32
    %c0_i32_0 = arith.constant 0 : i32
    return %arg0, %c0_i32 : i32, i32
  }
  func.func @transform_3(%arg0: i32, %arg1: i32) -> (i32, i32) {
    %c0_i32 = arith.constant 0 : i32
    %c0_i32_0 = arith.constant 0 : i32
    return %c0_i32, %arg1 : i32, i32
  }
  func.func @transform_4(%arg0: i32, %arg1: i32) -> (i32, i32) {
    %c0_i32 = arith.constant 0 : i32
    %c0_i32_0 = arith.constant 0 : i32
    return %arg0, %c0_i32 : i32, i32
  }
  func.func @transform_5(%arg0: i32, %arg1: i32) -> (i32, i32) {
    %c0_i32 = arith.constant 0 : i32
    %c0_i32_0 = arith.constant 0 : i32
    return %arg0, %c0_i32 : i32, i32
  }
  func.func @transform_6(%arg0: i32, %arg1: i32) -> (i32, i32) {
    %c0_i32 = arith.constant 0 : i32
    %c0_i32_0 = arith.constant 0 : i32
    return %arg0, %c0_i32 : i32, i32
  }
}

</mosaic_0001>

<llo_original>
// kernel: tpu_custom_call.1
$region0: #{tpu_custom_call.1}
  #allocation0 [shape = 'u32[]', space=smem, size = 0x4, offset = 0x4, fixed_abs, tag = 'smem constant byte address 0x4 - core index']
  #allocation1 [shape = 'u32[72,128]{1,0:T(1,128)}', space=vmem, size = 0x9000, scoped, tag = 'internal scratch']
  #allocation2 [shape = 'f32[128,1]{1,0:T(8,128)}', space=vmem, size = 0x10000, scoped, tag = 'scratch operand']
  #allocation3 [shape = 'f32[128,1]{1,0:T(8,128)}', space=vmem, size = 0x10000, scoped, tag = 'scratch operand']
  #allocation4 [shape = 'f32[128,1]{1,0:T(8,128)}', space=vmem, size = 0x10000, scoped, tag = 'scratch operand']
  #allocation5 [shape = 'f32[128,1]{1,0:T(8,128)}', space=vmem, size = 0x10000, scoped, tag = 'scratch operand']
  %s0 = inlined_call_operand.vmem [shape: bf16[256,32], index: 0, kind: input, shape index: {}]
  %s1 = inlined_call_operand.vmem [shape: bf16[256,32], index: 1, kind: input, shape index: {}]
  %s2 = inlined_call_operand.vmem [shape: s32[256,1], index: 2, kind: input, shape index: {}]
  %s3 = inlined_call_operand.vmem [shape: s32[1,256], index: 3, kind: input, shape index: {}]
  %s4 = inlined_call_operand.vmem [shape: f32[256,1], index: 4, kind: input, shape index: {}]
  %s5 = inlined_call_operand.vmem [shape: f32[256,1], index: 5, kind: output, shape index: {0}]
  %s6 = inlined_call_operand.vmem [shape: f32[256,1], index: 6, kind: output, shape index: {1}]
  %7 = xla_tuple %s5, %s6
  %s8 = sld [smem:[#allocation0]]
  $region69: #{tpu_custom_call.1} parent=0
    _
  %s10 = ssub.s32 1, %s8
  %s11 = scalar_select 0, %s10, %s8
  loop: start=0, step=1, limit=6
  $region2: #{tpu_custom_call.1} parent=0 // loop_pre_header
    _
  $region3: #{tpu_custom_call.1} parent=0 // loop_header
    %s13 = sphi 0, %s17
    %p14 = scmp.ge.s32.totalorder %s13, 6
    %s20 = sphi 0, %s32
    %s21 = sphi 0, %s28
    %s22 = sphi 0, %s20
    %s23 = sphi 0, %s21
    %s24 = sphi 0, %s22
    %s25 = sphi 0, %s23
    %s35 = sphi 0, %s37
    %s38 = sphi 0, %s35
    %s39 = sphi 0, %s38
    %s55 = sphi 0, %s39
    %s61 = sphi 0, %s63
    %s64 = sphi 0, %s61
    %s65 = sphi 0, %s64
    %s81 = sphi 0, %s65
    %s87 = sphi 0, %s89
    %s90 = sphi 0, %s87
    %s91 = sphi 0, %s90
    %s107 = sphi 0, %s91
    %s113 = sphi 0, %s115
    %s116 = sphi 0, %s113
    %s117 = sphi 0, %s116
    %s133 = sphi 0, %s117
    %s139 = sphi 0, %s141
    %s142 = sphi 0, %s139
    %s143 = sphi 0, %s142
    %s159 = sphi 0, %s143
    %s165 = sphi 0, %s167
    %s168 = sphi 0, %s165
    %s169 = sphi 0, %s168
    %s185 = sphi 0, %s169
    %s191 = sphi 0, %s193
    %s194 = sphi 0, %s191
    %s195 = sphi 0, %s194
    %s211 = sphi 0, %s195
  $region4: #{tpu_custom_call.1} parent=0 // loop_header_branch
    %16 = sbr.rel (%p14) target = $region8
  $region5: #{tpu_custom_call.1} parent=0 // loop_body
    %s18 = ssub.s32 %s13, 1
    %s19 = ssub.s32 %s13, 2
    %s26 = sadd.s32 1, %s21
    %p27 = scmp.ge.s32.totalorder %s26, 2
    %s28 = scalar_select %p27, 0, %s26
    %s29 = sadd.s32 1, %s20
    %s30 = scalar_select %p27, %s29, %s20
    %p31 = scmp.ge.s32.totalorder %s30, 2
    %s32 = scalar_select %p31, 0, %s30
    %s33 = ssub.s32 %s20, %s32
    %p34 = scmp.eq.s32.totalorder %s33, 0
    %s36 = sadd.s32 %s35, 1
    %s37 = scalar_select %p34, %s35, %s36
    %p40 = pneg %p34
    %p41 = scmp.eq.s32.totalorder %s13, 3
    %p42 = por %p40, %p41
    %p43 = scmp.ne.s32.totalorder %s35, %s38
    %p44 = scmp.eq.s32.totalorder %s13, 0
    %p45 = por %p43, %p44
    %p46 = scmp.ne.s32.totalorder %s35, %s38
    %p47 = scmp.eq.s32.totalorder %s18, 3
    %p48 = por %p46, %p47
    %p49 = scmp.ne.s32.totalorder %s38, %s39
    %p50 = scmp.eq.s32.totalorder %s18, 0
    %p51 = por %p49, %p50
    %p52 = scmp.ne.s32.totalorder %s38, %s39
    %p53 = scmp.eq.s32.totalorder %s19, 3
    %p54 = por %p52, %p53
    %p56 = scmp.ne.s32.totalorder %s39, %s55
    %p57 = scmp.eq.s32.totalorder %s19, 0
    %p58 = por %p56, %p57
    %s59 = ssub.s32 %s21, %s28
    %p60 = scmp.eq.s32.totalorder %s59, 0
    %s62 = sadd.s32 %s61, 1
    %s63 = scalar_select %p60, %s61, %s62
    %p66 = pneg %p60
    %p67 = scmp.eq.s32.totalorder %s13, 3
    %p68 = por %p66, %p67
    %p69 = scmp.ne.s32.totalorder %s61, %s64
    %p70 = scmp.eq.s32.totalorder %s13, 0
    %p71 = por %p69, %p70
    %p72 = scmp.ne.s32.totalorder %s61, %s64
    %p73 = scmp.eq.s32.totalorder %s18, 3
    %p74 = por %p72, %p73
    %p75 = scmp.ne.s32.totalorder %s64, %s65
    %p76 = scmp.eq.s32.totalorder %s18, 0
    %p77 = por %p75, %p76
    %p78 = scmp.ne.s32.totalorder %s64, %s65
    %p79 = scmp.eq.s32.totalorder %s19, 3
    %p80 = por %p78, %p79
    %p82 = scmp.ne.s32.totalorder %s65, %s81
    %p83 = scmp.eq.s32.totalorder %s19, 0
    %p84 = por %p82, %p83
    %s85 = ssub.s32 %s20, %s32
    %p86 = scmp.eq.s32.totalorder %s85, 0
    %s88 = sadd.s32 %s87, 1
    %s89 = scalar_select %p86, %s87, %s88
    %p92 = pneg %p86
    %p93 = scmp.eq.s32.totalorder %s13, 3
    %p94 = por %p92, %p93
    %p95 = scmp.ne.s32.totalorder %s87, %s90
    %p96 = scmp.eq.s32.totalorder %s13, 0
    %p97 = por %p95, %p96
    %p98 = scmp.ne.s32.totalorder %s87, %s90
    %p99 = scmp.eq.s32.totalorder %s18, 3
    %p100 = por %p98, %p99
    %p101 = scmp.ne.s32.totalorder %s90, %s91
    %p102 = scmp.eq.s32.totalorder %s18, 0
    %p103 = por %p101, %p102
    %p104 = scmp.ne.s32.totalorder %s90, %s91
    %p105 = scmp.eq.s32.totalorder %s19, 3
    %p106 = por %p104, %p105
    %p108 = scmp.ne.s32.totalorder %s91, %s107
    %p109 = scmp.eq.s32.totalorder %s19, 0
    %p110 = por %p108, %p109
    %s111 = ssub.s32 %s21, %s28
    %p112 = scmp.eq.s32.totalorder %s111, 0
    %s114 = sadd.s32 %s113, 1
    %s115 = scalar_select %p112, %s113, %s114
    %p118 = pneg %p112
    %p119 = scmp.eq.s32.totalorder %s13, 3
    %p120 = por %p118, %p119
    %p121 = scmp.ne.s32.totalorder %s113, %s116
    %p122 = scmp.eq.s32.totalorder %s13, 0
    %p123 = por %p121, %p122
    %p124 = scmp.ne.s32.totalorder %s113, %s116
    %p125 = scmp.eq.s32.totalorder %s18, 3
    %p126 = por %p124, %p125
    %p127 = scmp.ne.s32.totalorder %s116, %s117
    %p128 = scmp.eq.s32.totalorder %s18, 0
    %p129 = por %p127, %p128
    %p130 = scmp.ne.s32.totalorder %s116, %s117
    %p131 = scmp.eq.s32.totalorder %s19, 3
    %p132 = por %p130, %p131
    %p134 = scmp.ne.s32.totalorder %s117, %s133
    %p135 = scmp.eq.s32.totalorder %s19, 0
    %p136 = por %p134, %p135
    %s137 = ssub.s32 %s20, %s32
    %p138 = scmp.eq.s32.totalorder %s137, 0
    %s140 = sadd.s32 %s139, 1
    %s141 = scalar_select %p138, %s139, %s140
    %p144 = pneg %p138
    %p145 = scmp.eq.s32.totalorder %s13, 3
    %p146 = por %p144, %p145
    %p147 = scmp.ne.s32.totalorder %s139, %s142
    %p148 = scmp.eq.s32.totalorder %s13, 0
    %p149 = por %p147, %p148
    %p150 = scmp.ne.s32.totalorder %s139, %s142
    %p151 = scmp.eq.s32.totalorder %s18, 3
    %p152 = por %p150, %p151
    %p153 = scmp.ne.s32.totalorder %s142, %s143
    %p154 = scmp.eq.s32.totalorder %s18, 0
    %p155 = por %p153, %p154
    %p156 = scmp.ne.s32.totalorder %s142, %s143
    %p157 = scmp.eq.s32.totalorder %s19, 3
    %p158 = por %p156, %p157
    %p160 = scmp.ne.s32.totalorder %s143, %s159
    %p161 = scmp.eq.s32.totalorder %s19, 0
    %p162 = por %p160, %p161
    %s163 = ssub.s32 %s20, %s32
    %p164 = scmp.eq.s32.totalorder %s163, 0
    %s166 = sadd.s32 %s165, 1
    %s167 = scalar_select %p164, %s165, %s166
    %p170 = pneg %p164
    %p171 = scmp.eq.s32.totalorder %s13, 3
    %p172 = por %p170, %p171
    %p173 = scmp.ne.s32.totalorder %s165, %s168
    %p174 = scmp.eq.s32.totalorder %s13, 0
    %p175 = por %p173, %p174
    %p176 = scmp.ne.s32.totalorder %s165, %s168
    %p177 = scmp.eq.s32.totalorder %s18, 3
    %p178 = por %p176, %p177
    %p179 = scmp.ne.s32.totalorder %s168, %s169
    %p180 = scmp.eq.s32.totalorder %s18, 0
    %p181 = por %p179, %p180
    %p182 = scmp.ne.s32.totalorder %s168, %s169
    %p183 = scmp.eq.s32.totalorder %s19, 3
    %p184 = por %p182, %p183
    %p186 = scmp.ne.s32.totalorder %s169, %s185
    %p187 = scmp.eq.s32.totalorder %s19, 0
    %p188 = por %p186, %p187
    %s189 = ssub.s32 %s20, %s32
    %p190 = scmp.eq.s32.totalorder %s189, 0
    %s192 = sadd.s32 %s191, 1
    %s193 = scalar_select %p190, %s191, %s192
    %p196 = pneg %p190
    %p197 = scmp.eq.s32.totalorder %s13, 3
    %p198 = por %p196, %p197
    %p199 = scmp.ne.s32.totalorder %s191, %s194
    %p200 = scmp.eq.s32.totalorder %s13, 0
    %p201 = por %p199, %p200
    %p202 = scmp.ne.s32.totalorder %s191, %s194
    %p203 = scmp.eq.s32.totalorder %s18, 3
    %p204 = por %p202, %p203
    %p205 = scmp.ne.s32.totalorder %s194, %s195
    %p206 = scmp.eq.s32.totalorder %s18, 0
    %p207 = por %p205, %p206
    %p208 = scmp.ne.s32.totalorder %s194, %s195
    %p209 = scmp.eq.s32.totalorder %s19, 3
    %p210 = por %p208, %p209
    %p212 = scmp.ne.s32.totalorder %s195, %s211
    %p213 = scmp.eq.s32.totalorder %s19, 0
    %p214 = por %p212, %p213
    %p215 = scmp.le.s32.totalorder 1, %s13
    %p216 = scmp.lt.s32.totalorder %s13, 5
    %p217 = pnand %p215, %p216
    %p218 = pneg %p217
    // Predicated region
    $region9: #{tpu_custom_call.1} parent=5 // pred_check
      _
    $region10: #{tpu_custom_call.1} parent=5 // pred_check_branch
      %220 = sbr.rel (%p217) target = $region12
    $region11: #{tpu_custom_call.1} parent=5 // pred_region
      %s221 = ssub.s32 %s13, 1
    $region12: #{tpu_custom_call.1} parent=5 // pred_fallthru
      _
    %p222 = scmp.lt.s32.totalorder %s13, 4
    // Predicated region
    $region13: #{tpu_custom_call.1} parent=5 // pred_check
      %p223 = pneg %p222
    $region14: #{tpu_custom_call.1} parent=5 // pred_check_branch
      %225 = sbr.rel (%p223) target = $region16
    $region15: #{tpu_custom_call.1} parent=5 // pred_region
      // Predicated region
      $region17: #{tpu_custom_call.1} parent=15 // pred_check
        %p226 = pneg %p45
      $region18: #{tpu_custom_call.1} parent=15 // pred_check_branch
        %228 = sbr.rel (%p226) target = $region20
      $region19: #{tpu_custom_call.1} parent=15 // pred_region
        %s229 = smul.u32 16, %s20
        %p230 = scmp.lt.s32.totalorder %s229, 31
        %s231 = scalar_select %p230, %s229, 31
        %s232 = smul.addr %s231, 4
        %s233 = scalar_lea.vmem %s0, %s232
        %s234 = smul.u32 16, %s20
      $region20: #{tpu_custom_call.1} parent=15 // pred_fallthru
        _
      // Predicated region
      $region21: #{tpu_custom_call.1} parent=15 // pred_check
        %p235 = pneg %p71
      $region22: #{tpu_custom_call.1} parent=15 // pred_check_branch
        %237 = sbr.rel (%p235) target = $region24
      $region23: #{tpu_custom_call.1} parent=15 // pred_region
        %s238 = smul.u32 16, %s21
        %p239 = scmp.lt.s32.totalorder %s238, 31
        %s240 = scalar_select %p239, %s238, 31
        %s241 = smul.addr %s240, 4
        %s242 = scalar_lea.vmem %s1, %s241
        %s243 = smul.u32 16, %s21
      $region24: #{tpu_custom_call.1} parent=15 // pred_fallthru
        _
      // Predicated region
      $region25: #{tpu_custom_call.1} parent=15 // pred_check
        %p244 = pneg %p97
      $region26: #{tpu_custom_call.1} parent=15 // pred_check_branch
        %246 = sbr.rel (%p244) target = $region28
      $region27: #{tpu_custom_call.1} parent=15 // pred_region
        %s247 = smul.u32 16, %s20
        %p248 = scmp.lt.s32.totalorder %s247, 31
        %s249 = scalar_select %p248, %s247, 31
        %s250 = smul.addr %s249, 8
        %s251 = scalar_lea.vmem %s2, %s250
        %s252 = smul.u32 16, %s20
      $region28: #{tpu_custom_call.1} parent=15 // pred_fallthru
        _
      // Predicated region
      $region29: #{tpu_custom_call.1} parent=15 // pred_check
        %p253 = pneg %p123
      $region30: #{tpu_custom_call.1} parent=15 // pred_check_branch
        %255 = sbr.rel (%p253) target = $region32
      $region31: #{tpu_custom_call.1} parent=15 // pred_region
        %p256 = scmp.lt.s32.totalorder %s21, 1
        %s257 = scalar_select %p256, %s21, 1
        %s258 = scalar_lea.vmem %s3, %s257
      $region32: #{tpu_custom_call.1} parent=15 // pred_fallthru
        _
      // Predicated region
      $region33: #{tpu_custom_call.1} parent=15 // pred_check
        %p259 = pneg %p149
      $region34: #{tpu_custom_call.1} parent=15 // pred_check_branch
        %261 = sbr.rel (%p259) target = $region36
      $region35: #{tpu_custom_call.1} parent=15 // pred_region
        %s262 = smul.u32 16, %s20
        %p263 = scmp.lt.s32.totalorder %s262, 31
        %s264 = scalar_select %p263, %s262, 31
        %s265 = smul.addr %s264, 8
        %s266 = scalar_lea.vmem %s4, %s265
        %s267 = smul.u32 16, %s20
      $region36: #{tpu_custom_call.1} parent=15 // pred_fallthru
        _
    $region16: #{tpu_custom_call.1} parent=5 // pred_fallthru
      _
    %p268 = scmp.le.s32.totalorder 1, %s13
    %p269 = scmp.lt.s32.totalorder %s13, 5
    %p270 = pnand %p268, %p269
    %p271 = pneg %p270
    // Predicated region
    $region37: #{tpu_custom_call.1} parent=5 // pred_check
      _
    $region38: #{tpu_custom_call.1} parent=5 // pred_check_branch
      %273 = sbr.rel (%p270) target = $region40
    $region39: #{tpu_custom_call.1} parent=5 // pred_region
      %s274 = ssub.s32 %s13, 1
      %s275 = smul.u32 16, %s22
      %p276 = scmp.lt.s32.totalorder %s275, 31
      %s277 = scalar_select %p276, %s275, 31
      %s278 = smul.addr %s277, 4
      %s279 = scalar_lea.vmem %s0, %s278
      %p280 = pneg %p51
      %p281 = pneg %p48
      %s282 = smul.u32 16, %s23
      %p283 = scmp.lt.s32.totalorder %s282, 31
      %s284 = scalar_select %p283, %s282, 31
      %s285 = smul.addr %s284, 4
      %s286 = scalar_lea.vmem %s1, %s285
      %p287 = pneg %p77
      %p288 = pneg %p74
      %s289 = smul.u32 16, %s22
      %p290 = scmp.lt.s32.totalorder %s289, 31
      %s291 = scalar_select %p290, %s289, 31
      %s292 = smul.addr %s291, 8
      %s293 = scalar_lea.vmem %s2, %s292
      %p294 = pneg %p103
      %p295 = pneg %p100
      %p296 = scmp.lt.s32.totalorder %s23, 1
      %s297 = scalar_select %p296, %s23, 1
      %s298 = scalar_lea.vmem %s3, %s297
      %p299 = pneg %p129
      %p300 = pneg %p126
      %s301 = smul.u32 16, %s22
      %p302 = scmp.lt.s32.totalorder %s301, 31
      %s303 = scalar_select %p302, %s301, 31
      %s304 = smul.addr %s303, 8
      %s305 = scalar_lea.vmem %s4, %s304
      %p306 = pneg %p155
      %p307 = pneg %p152
      %p308 = pneg %p181
      %p309 = pneg %p178
      %s310 = smul.u32 16, %s22
      %p311 = scmp.lt.s32.totalorder %s310, 31
      %s312 = scalar_select %p311, %s310, 31
      %s313 = smul.addr %s312, 8
      %s314 = scalar_lea.vmem %s5, %s313
      %p315 = pneg %p207
      %p316 = pneg %p204
      %s317 = smul.u32 16, %s22
      %p318 = scmp.lt.s32.totalorder %s317, 31
      %s319 = scalar_select %p318, %s317, 31
      %s320 = smul.addr %s319, 8
      %s321 = scalar_lea.vmem %s6, %s320
      %s322 = smul.u32 16, %s22
      %p323 = scmp.lt.s32.totalorder %s322, 31
      %s324 = scalar_select %p323, %s322, 31
      %s325 = smul.addr %s324, 4
      %s326 = scalar_lea.vmem %s0, %s325
      %s327 = smul.u32 16, %s22
      %s328 = smul.u32 16, %s23
      %p329 = scmp.lt.s32.totalorder %s328, 31
      %s330 = scalar_select %p329, %s328, 31
      %s331 = smul.addr %s330, 4
      %s332 = scalar_lea.vmem %s1, %s331
      %s333 = smul.u32 16, %s23
      %s334 = smul.u32 16, %s22
      %p335 = scmp.lt.s32.totalorder %s334, 31
      %s336 = scalar_select %p335, %s334, 31
      %s337 = smul.addr %s336, 8
      %s338 = scalar_lea.vmem %s2, %s337
      %s339 = smul.u32 16, %s22
      %p340 = scmp.lt.s32.totalorder %s23, 1
      %s341 = scalar_select %p340, %s23, 1
      %s342 = scalar_lea.vmem %s3, %s341
      %s343 = smul.u32 16, %s22
      %p344 = scmp.lt.s32.totalorder %s343, 31
      %s345 = scalar_select %p344, %s343, 31
      %s346 = smul.addr %s345, 8
      %s347 = scalar_lea.vmem %s4, %s346
      %s348 = smul.u32 16, %s22
      %s349 = smul.u32 16, %s22
      %p350 = scmp.lt.s32.totalorder %s349, 31
      %s351 = scalar_select %p350, %s349, 31
      %s352 = smul.addr %s351, 8
      %s353 = scalar_lea.vmem %s5, %s352
      %s354 = smul.u32 16, %s22
      %s355 = smul.u32 16, %s22
      %p356 = scmp.lt.s32.totalorder %s355, 31
      %s357 = scalar_select %p356, %s355, 31
      %s358 = smul.addr %s357, 8
      %s359 = scalar_lea.vmem %s6, %s358
      %s360 = smul.u32 16, %s22
      %p361 = scmp.eq.s32.totalorder %s23, 0
      // Predicated region
      $region41: #{tpu_custom_call.1} parent=39 // pred_check
        %p362 = pneg %p361
      $region42: #{tpu_custom_call.1} parent=39 // pred_check_branch
        %364 = sbr.rel (%p362) target = $region44
      $region43: #{tpu_custom_call.1} parent=39 // pred_region
        %vm365 = vcmask 7168
        %366 = vst.msk [vmem:[#allocation2] sm:$0xff] %vm365, -1e+30
        %367 = vst.msk [vmem:[#allocation2 + $0x8] sm:$0xff] %vm365, -1e+30
        %368 = vst.msk [vmem:[#allocation2 + $0x10] sm:$0xff] %vm365, -1e+30
        %369 = vst.msk [vmem:[#allocation2 + $0x18] sm:$0xff] %vm365, -1e+30
        %370 = vst.msk [vmem:[#allocation2 + $0x20] sm:$0xff] %vm365, -1e+30
        %371 = vst.msk [vmem:[#allocation2 + $0x28] sm:$0xff] %vm365, -1e+30
        %372 = vst.msk [vmem:[#allocation2 + $0x30] sm:$0xff] %vm365, -1e+30
        %373 = vst.msk [vmem:[#allocation2 + $0x38] sm:$0xff] %vm365, -1e+30
        %374 = vst.msk [vmem:[#allocation2 + $0x40] sm:$0xff] %vm365, -1e+30
        %375 = vst.msk [vmem:[#allocation2 + $0x48] sm:$0xff] %vm365, -1e+30
        %376 = vst.msk [vmem:[#allocation2 + $0x50] sm:$0xff] %vm365, -1e+30
        %377 = vst.msk [vmem:[#allocation2 + $0x58] sm:$0xff] %vm365, -1e+30
        %378 = vst.msk [vmem:[#allocation2 + $0x60] sm:$0xff] %vm365, -1e+30
        %379 = vst.msk [vmem:[#allocation2 + $0x68] sm:$0xff] %vm365, -1e+30
        %380 = vst.msk [vmem:[#allocation2 + $0x70] sm:$0xff] %vm365, -1e+30
        %381 = vst.msk [vmem:[#allocation2 + $0x78] sm:$0xff] %vm365, -1e+30
        %382 = vst.msk [vmem:[#allocation3] sm:$0xff] %vm365, 0.0
        %383 = vst.msk [vmem:[#allocation3 + $0x8] sm:$0xff] %vm365, 0.0
        %384 = vst.msk [vmem:[#allocation3 + $0x10] sm:$0xff] %vm365, 0.0
        %385 = vst.msk [vmem:[#allocation3 + $0x18] sm:$0xff] %vm365, 0.0
        %386 = vst.msk [vmem:[#allocation3 + $0x20] sm:$0xff] %vm365, 0.0
        %387 = vst.msk [vmem:[#allocation3 + $0x28] sm:$0xff] %vm365, 0.0
        %388 = vst.msk [vmem:[#allocation3 + $0x30] sm:$0xff] %vm365, 0.0
        %389 = vst.msk [vmem:[#allocation3 + $0x38] sm:$0xff] %vm365, 0.0
        %390 = vst.msk [vmem:[#allocation3 + $0x40] sm:$0xff] %vm365, 0.0
        %391 = vst.msk [vmem:[#allocation3 + $0x48] sm:$0xff] %vm365, 0.0
        %392 = vst.msk [vmem:[#allocation3 + $0x50] sm:$0xff] %vm365, 0.0
        %393 = vst.msk [vmem:[#allocation3 + $0x58] sm:$0xff] %vm365, 0.0
        %394 = vst.msk [vmem:[#allocation3 + $0x60] sm:$0xff] %vm365, 0.0
        %395 = vst.msk [vmem:[#allocation3 + $0x68] sm:$0xff] %vm365, 0.0
        %396 = vst.msk [vmem:[#allocation3 + $0x70] sm:$0xff] %vm365, 0.0
        %397 = vst.msk [vmem:[#allocation3 + $0x78] sm:$0xff] %vm365, 0.0
        %398 = vst.msk [vmem:[#allocation4] sm:$0xff] %vm365, 0.0
        %399 = vst.msk [vmem:[#allocation4 + $0x8] sm:$0xff] %vm365, 0.0
        %400 = vst.msk [vmem:[#allocation4 + $0x10] sm:$0xff] %vm365, 0.0
        %401 = vst.msk [vmem:[#allocation4 + $0x18] sm:$0xff] %vm365, 0.0
        %402 = vst.msk [vmem:[#allocation4 + $0x20] sm:$0xff] %vm365, 0.0
        %403 = vst.msk [vmem:[#allocation4 + $0x28] sm:$0xff] %vm365, 0.0
        %404 = vst.msk [vmem:[#allocation4 + $0x30] sm:$0xff] %vm365, 0.0
        %405 = vst.msk [vmem:[#allocation4 + $0x38] sm:$0xff] %vm365, 0.0
        %406 = vst.msk [vmem:[#allocation4 + $0x40] sm:$0xff] %vm365, 0.0
        %407 = vst.msk [vmem:[#allocation4 + $0x48] sm:$0xff] %vm365, 0.0
        %408 = vst.msk [vmem:[#allocation4 + $0x50] sm:$0xff] %vm365, 0.0
        %409 = vst.msk [vmem:[#allocation4 + $0x58] sm:$0xff] %vm365, 0.0
        %410 = vst.msk [vmem:[#allocation4 + $0x60] sm:$0xff] %vm365, 0.0
        %411 = vst.msk [vmem:[#allocation4 + $0x68] sm:$0xff] %vm365, 0.0
        %412 = vst.msk [vmem:[#allocation4 + $0x70] sm:$0xff] %vm365, 0.0
        %413 = vst.msk [vmem:[#allocation4 + $0x78] sm:$0xff] %vm365, 0.0
        %414 = vst.msk [vmem:[#allocation5] sm:$0xff] %vm365, 0.0
        %415 = vst.msk [vmem:[#allocation5 + $0x8] sm:$0xff] %vm365, 0.0
        %416 = vst.msk [vmem:[#allocation5 + $0x10] sm:$0xff] %vm365, 0.0
        %417 = vst.msk [vmem:[#allocation5 + $0x18] sm:$0xff] %vm365, 0.0
        %418 = vst.msk [vmem:[#allocation5 + $0x20] sm:$0xff] %vm365, 0.0
        %419 = vst.msk [vmem:[#allocation5 + $0x28] sm:$0xff] %vm365, 0.0
        %420 = vst.msk [vmem:[#allocation5 + $0x30] sm:$0xff] %vm365, 0.0
        %421 = vst.msk [vmem:[#allocation5 + $0x38] sm:$0xff] %vm365, 0.0
        %422 = vst.msk [vmem:[#allocation5 + $0x40] sm:$0xff] %vm365, 0.0
        %423 = vst.msk [vmem:[#allocation5 + $0x48] sm:$0xff] %vm365, 0.0
        %424 = vst.msk [vmem:[#allocation5 + $0x50] sm:$0xff] %vm365, 0.0
        %425 = vst.msk [vmem:[#allocation5 + $0x58] sm:$0xff] %vm365, 0.0
        %426 = vst.msk [vmem:[#allocation5 + $0x60] sm:$0xff] %vm365, 0.0
        %427 = vst.msk [vmem:[#allocation5 + $0x68] sm:$0xff] %vm365, 0.0
        %428 = vst.msk [vmem:[#allocation5 + $0x70] sm:$0xff] %vm365, 0.0
        %429 = vst.msk [vmem:[#allocation5 + $0x78] sm:$0xff] %vm365, 0.0
      $region44: #{tpu_custom_call.1} parent=39 // pred_fallthru
        _
      %v430 = vld [vmem:[%s326] sm:$0xf]
      %v431 = vld [vmem:[%s326 + $0x4] sm:$0xf]
      %v432 = vld [vmem:[%s326 + $0x8] sm:$0xf]
      %v433 = vld [vmem:[%s326 + $0xc] sm:$0xf]
      %v434 = vld [vmem:[%s326 + $0x10] sm:$0xf]
      %v435 = vld [vmem:[%s326 + $0x14] sm:$0xf]
      %v436 = vld [vmem:[%s326 + $0x18] sm:$0xf]
      %v437 = vld [vmem:[%s326 + $0x1c] sm:$0xf]
      %v438 = vld [vmem:[%s326 + $0x20] sm:$0xf]
      %v439 = vld [vmem:[%s326 + $0x24] sm:$0xf]
      %v440 = vld [vmem:[%s326 + $0x28] sm:$0xf]
      %v441 = vld [vmem:[%s326 + $0x2c] sm:$0xf]
      %v442 = vld [vmem:[%s326 + $0x30] sm:$0xf]
      %v443 = vld [vmem:[%s326 + $0x34] sm:$0xf]
      %v444 = vld [vmem:[%s326 + $0x38] sm:$0xf]
      %v445 = vld [vmem:[%s326 + $0x3c] sm:$0xf]
      %v446 = vunpack.c.l.bf16 %v430
      %v447 = vunpack.c.l.bf16 %v431
      %v448 = vunpack.c.l.bf16 %v432
      %v449 = vunpack.c.l.bf16 %v433
      %v450 = vunpack.c.l.bf16 %v434
      %v451 = vunpack.c.l.bf16 %v435
      %v452 = vunpack.c.l.bf16 %v436
      %v453 = vunpack.c.l.bf16 %v437
      %v454 = vunpack.c.l.bf16 %v438
      %v455 = vunpack.c.l.bf16 %v439
      %v456 = vunpack.c.l.bf16 %v440
      %v457 = vunpack.c.l.bf16 %v441
      %v458 = vunpack.c.l.bf16 %v442
      %v459 = vunpack.c.l.bf16 %v443
      %v460 = vunpack.c.l.bf16 %v444
      %v461 = vunpack.c.l.bf16 %v445
      %v462 = vmul.f32 %v446, 5.0
      %v463 = vmul.f32 %v447, 5.0
      %v464 = vmul.f32 %v448, 5.0
      %v465 = vmul.f32 %v449, 5.0
      %v466 = vmul.f32 %v450, 5.0
      %v467 = vmul.f32 %v451, 5.0
      %v468 = vmul.f32 %v452, 5.0
      %v469 = vmul.f32 %v453, 5.0
      %v470 = vmul.f32 %v454, 5.0
      %v471 = vmul.f32 %v455, 5.0
      %v472 = vmul.f32 %v456, 5.0
      %v473 = vmul.f32 %v457, 5.0
      %v474 = vmul.f32 %v458, 5.0
      %v475 = vmul.f32 %v459, 5.0
      %v476 = vmul.f32 %v460, 5.0
      %v477 = vmul.f32 %v461, 5.0
      %v478 = vpack.c.bf16 %v463, %v462
      %v479 = vpack.c.bf16 %v465, %v464
      %v480 = vpack.c.bf16 %v467, %v466
      %v481 = vpack.c.bf16 %v469, %v468
      %v482 = vpack.c.bf16 %v471, %v470
      %v483 = vpack.c.bf16 %v473, %v472
      %v484 = vpack.c.bf16 %v475, %v474
      %v485 = vpack.c.bf16 %v477, %v476
      %v486 = vld [vmem:[%s332] sm:$0xf]
      %v487 = vld [vmem:[%s332 + $0x4] sm:$0xf]
      %v488 = vld [vmem:[%s332 + $0x8] sm:$0xf]
      %v489 = vld [vmem:[%s332 + $0xc] sm:$0xf]
      %v490 = vld [vmem:[%s332 + $0x10] sm:$0xf]
      %v491 = vld [vmem:[%s332 + $0x14] sm:$0xf]
      %v492 = vld [vmem:[%s332 + $0x18] sm:$0xf]
      %v493 = vld [vmem:[%s332 + $0x1c] sm:$0xf]
      %v494 = vld [vmem:[%s332 + $0x20] sm:$0xf]
      %v495 = vld [vmem:[%s332 + $0x24] sm:$0xf]
      %v496 = vld [vmem:[%s332 + $0x28] sm:$0xf]
      %v497 = vld [vmem:[%s332 + $0x2c] sm:$0xf]
      %v498 = vld [vmem:[%s332 + $0x30] sm:$0xf]
      %v499 = vld [vmem:[%s332 + $0x34] sm:$0xf]
      %v500 = vld [vmem:[%s332 + $0x38] sm:$0xf]
      %v501 = vld [vmem:[%s332 + $0x3c] sm:$0xf]
      %v518 = vunpack.c.l.b16 %v486
      %v519 = vunpack.c.l.b16 %v487
      %v520 = vunpack.c.l.b16 %v488
      %v521 = vunpack.c.l.b16 %v489
      %v522 = vunpack.c.l.b16 %v490
      %v523 = vunpack.c.l.b16 %v491
      %v524 = vunpack.c.l.b16 %v492
      %v525 = vunpack.c.l.b16 %v493
      %v526 = vunpack.c.l.b16 %v494
      %v527 = vunpack.c.l.b16 %v495
      %v528 = vunpack.c.l.b16 %v496
      %v529 = vunpack.c.l.b16 %v497
      %v530 = vunpack.c.l.b16 %v498
      %v531 = vunpack.c.l.b16 %v499
      %v532 = vunpack.c.l.b16 %v500
      %v533 = vunpack.c.l.b16 %v501
      %v534 = vpack.c.b16 %v519, %v518
      %v535 = vpack.c.b16 %v521, %v520
      %v536 = vpack.c.b16 %v523, %v522
      %v537 = vpack.c.b16 %v525, %v524
      %v538 = vpack.c.b16 %v527, %v526
      %v539 = vpack.c.b16 %v529, %v528
      %v540 = vpack.c.b16 %v531, %v530
      %v541 = vpack.c.b16 %v533, %v532
      %vm542 = vcmask 261120
      %v544 = vsel %vm542, %v478, 0
      %v547 = vsel %vm542, %v479, 0
      %v550 = vsel %vm542, %v480, 0
      %v553 = vsel %vm542, %v481, 0
      %v556 = vsel %vm542, %v482, 0
      %v559 = vsel %vm542, %v483, 0
      %v562 = vsel %vm542, %v484, 0
      %v565 = vsel %vm542, %v485, 0
      %v568 = vsel %vm542, %v534, 0
      %v571 = vsel %vm542, %v535, 0
      %v574 = vsel %vm542, %v536, 0
      %v577 = vsel %vm542, %v537, 0
      %v580 = vsel %vm542, %v538, 0
      %v583 = vsel %vm542, %v539, 0
      %v586 = vsel %vm542, %v540, 0
      %v589 = vsel %vm542, %v541, 0
      %591 = vmatpush.bf16.xpose.msra.mxu0 %v589
      %592 = vmatpush.bf16.xpose.msra.mxu0 %v586
      %593 = vmatpush.bf16.xpose.msra.mxu0 %v583
      %594 = vmatpush.bf16.xpose.msra.mxu0 %v580
      %595 = vmatpush.bf16.xpose.msra.mxu0 %v577
      %596 = vmatpush.bf16.xpose.msra.mxu0 %v574
      %597 = vmatpush.bf16.xpose.msra.mxu0 %v571
      %598 = vmatpush.bf16.xpose.msra.mxu0 %v568
      %599 = vmatmul.bf16.gmra.mxu0 %v544
      %v600 = vpop.f32.mrf.mxu0
      %v601 = vadd.f32 0.0, %v600
      %v602 = vpop.f32.mrf.mxu0
      %v603 = vadd.f32 0.0, %v602
      %604 = vmatmul.bf16.gmra.mxu0 %v547
      %v605 = vpop.f32.mrf.mxu0
      %v606 = vadd.f32 0.0, %v605
      %v607 = vpop.f32.mrf.mxu0
      %v608 = vadd.f32 0.0, %v607
      %609 = vmatmul.bf16.gmra.mxu0 %v550
      %v610 = vpop.f32.mrf.mxu0
      %v611 = vadd.f32 0.0, %v610
      %v612 = vpop.f32.mrf.mxu0
      %v613 = vadd.f32 0.0, %v612
      %614 = vmatmul.bf16.gmra.mxu0 %v553
      %v615 = vpop.f32.mrf.mxu0
      %v616 = vadd.f32 0.0, %v615
      %v617 = vpop.f32.mrf.mxu0
      %v618 = vadd.f32 0.0, %v617
      %619 = vmatmul.bf16.gmra.mxu0 %v556
      %v620 = vpop.f32.mrf.mxu0
      %v621 = vadd.f32 0.0, %v620
      %v622 = vpop.f32.mrf.mxu0
      %v623 = vadd.f32 0.0, %v622
      %624 = vmatmul.bf16.gmra.mxu0 %v559
      %v625 = vpop.f32.mrf.mxu0
      %v626 = vadd.f32 0.0, %v625
      %v627 = vpop.f32.mrf.mxu0
      %v628 = vadd.f32 0.0, %v627
      %629 = vmatmul.bf16.gmra.mxu0 %v562
      %v630 = vpop.f32.mrf.mxu0
      %v631 = vadd.f32 0.0, %v630
      %v632 = vpop.f32.mrf.mxu0
      %v633 = vadd.f32 0.0, %v632
      %634 = vmatmul.bf16.gmra.mxu0 %v565
      %v635 = vpop.f32.mrf.mxu0
      %v636 = vadd.f32 0.0, %v635
      %v637 = vpop.f32.mrf.mxu0
      %v638 = vadd.f32 0.0, %v637
      %639 = vdwg.mxu0
      %s640 = smul.u32 %s22, 128
      %s641 = smul.u32 %s23, 128
      %v642 = vlaneseq
      %v643 = vshrl.u32 %v642, 7
      %v644 = vadd.s32 %v643, 8
      %v645 = vadd.s32 %v643, 16
      %v646 = vadd.s32 %v643, 24
      %v647 = vadd.s32 %v643, 32
      %v648 = vadd.s32 %v643, 40
      %v649 = vadd.s32 %v643, 48
      %v650 = vadd.s32 %v643, 56
      %v651 = vadd.s32 %v643, 64
      %v652 = vadd.s32 %v643, 72
      %v653 = vadd.s32 %v643, 80
      %v654 = vadd.s32 %v643, 88
      %v655 = vadd.s32 %v643, 96
      %v656 = vadd.s32 %v643, 104
      %v657 = vadd.s32 %v643, 112
      %v658 = vadd.s32 %v643, 120
      %v659 = vstv %s640
      %v660 = vadd.s32 %v643, %v659
      %v661 = vadd.s32 %v644, %v659
      %v662 = vadd.s32 %v645, %v659
      %v663 = vadd.s32 %v646, %v659
      %v664 = vadd.s32 %v647, %v659
      %v665 = vadd.s32 %v648, %v659
      %v666 = vadd.s32 %v649, %v659
      %v667 = vadd.s32 %v650, %v659
      %v668 = vadd.s32 %v651, %v659
      %v669 = vadd.s32 %v652, %v659
      %v670 = vadd.s32 %v653, %v659
      %v671 = vadd.s32 %v654, %v659
      %v672 = vadd.s32 %v655, %v659
      %v673 = vadd.s32 %v656, %v659
      %v674 = vadd.s32 %v657, %v659
      %v675 = vadd.s32 %v658, %v659
      %v676 = vlaneseq
      %v677 = vand.u32 %v676, 127
      %v678 = vstv %s641
      %v679 = vadd.s32 %v677, %v678
      %vm680 = vcmp.ne.s32.totalorder %v660, %v679
      %vm681 = vcmp.ne.s32.totalorder %v661, %v679
      %vm682 = vcmp.ne.s32.totalorder %v662, %v679
      %vm683 = vcmp.ne.s32.totalorder %v663, %v679
      %vm684 = vcmp.ne.s32.totalorder %v664, %v679
      %vm685 = vcmp.ne.s32.totalorder %v665, %v679
      %vm686 = vcmp.ne.s32.totalorder %v666, %v679
      %vm687 = vcmp.ne.s32.totalorder %v667, %v679
      %vm688 = vcmp.ne.s32.totalorder %v668, %v679
      %vm689 = vcmp.ne.s32.totalorder %v669, %v679
      %vm690 = vcmp.ne.s32.totalorder %v670, %v679
      %vm691 = vcmp.ne.s32.totalorder %v671, %v679
      %vm692 = vcmp.ne.s32.totalorder %v672, %v679
      %vm693 = vcmp.ne.s32.totalorder %v673, %v679
      %vm694 = vcmp.ne.s32.totalorder %v674, %v679
      %vm695 = vcmp.ne.s32.totalorder %v675, %v679
      %v696 = vld [vmem:[%s338] sm:$0xff]
      %v697 = vld [vmem:[%s338 + $0x8] sm:$0xff]
      %v698 = vld [vmem:[%s338 + $0x10] sm:$0xff]
      %v699 = vld [vmem:[%s338 + $0x18] sm:$0xff]
      %v700 = vld [vmem:[%s338 + $0x20] sm:$0xff]
      %v701 = vld [vmem:[%s338 + $0x28] sm:$0xff]
      %v702 = vld [vmem:[%s338 + $0x30] sm:$0xff]
      %v703 = vld [vmem:[%s338 + $0x38] sm:$0xff]
      %v704 = vld [vmem:[%s338 + $0x40] sm:$0xff]
      %v705 = vld [vmem:[%s338 + $0x48] sm:$0xff]
      %v706 = vld [vmem:[%s338 + $0x50] sm:$0xff]
      %v707 = vld [vmem:[%s338 + $0x58] sm:$0xff]
      %v708 = vld [vmem:[%s338 + $0x60] sm:$0xff]
      %v709 = vld [vmem:[%s338 + $0x68] sm:$0xff]
      %v710 = vld [vmem:[%s338 + $0x70] sm:$0xff]
      %v711 = vld [vmem:[%s338 + $0x78] sm:$0xff]
      %v712 = vld [vmem:[%s342] sm:$0x1]
      %713 = vset.pattern.permute.xlu0 0
      %714 = vperm.xlu0 %713, %v696
      %v715 = vpop.permute.xlu0 %714
      %716 = vset.pattern.permute.xlu0 0
      %717 = vperm.xlu0 %716, %v697
      %v718 = vpop.permute.xlu0 %717
      %719 = vset.pattern.permute.xlu0 0
      %720 = vperm.xlu0 %719, %v698
      %v721 = vpop.permute.xlu0 %720
      %722 = vset.pattern.permute.xlu0 0
      %723 = vperm.xlu0 %722, %v699
      %v724 = vpop.permute.xlu0 %723
      %725 = vset.pattern.permute.xlu0 0
      %726 = vperm.xlu0 %725, %v700
      %v727 = vpop.permute.xlu0 %726
      %728 = vset.pattern.permute.xlu0 0
      %729 = vperm.xlu0 %728, %v701
      %v730 = vpop.permute.xlu0 %729
      %731 = vset.pattern.permute.xlu0 0
      %732 = vperm.xlu0 %731, %v702
      %v733 = vpop.permute.xlu0 %732
      %734 = vset.pattern.permute.xlu0 0
      %735 = vperm.xlu0 %734, %v703
      %v736 = vpop.permute.xlu0 %735
      %737 = vset.pattern.permute.xlu0 0
      %738 = vperm.xlu0 %737, %v704
      %v739 = vpop.permute.xlu0 %738
      %740 = vset.pattern.permute.xlu0 0
      %741 = vperm.xlu0 %740, %v705
      %v742 = vpop.permute.xlu0 %741
      %743 = vset.pattern.permute.xlu0 0
      %744 = vperm.xlu0 %743, %v706
      %v745 = vpop.permute.xlu0 %744
      %746 = vset.pattern.permute.xlu0 0
      %747 = vperm.xlu0 %746, %v707
      %v748 = vpop.permute.xlu0 %747
      %749 = vset.pattern.permute.xlu0 0
      %750 = vperm.xlu0 %749, %v708
      %v751 = vpop.permute.xlu0 %750
      %752 = vset.pattern.permute.xlu0 0
      %753 = vperm.xlu0 %752, %v709
      %v754 = vpop.permute.xlu0 %753
      %755 = vset.pattern.permute.xlu0 0
      %756 = vperm.xlu0 %755, %v710
      %v757 = vpop.permute.xlu0 %756
      %758 = vset.pattern.permute.xlu0 0
      %759 = vperm.xlu0 %758, %v711
      %v760 = vpop.permute.xlu0 %759
      %v761 = vperm.slane %v712, 0
      %vm762 = vcmp.eq.s32.totalorder %v715, %v761
      %vm763 = vcmp.eq.s32.totalorder %v718, %v761
      %vm764 = vcmp.eq.s32.totalorder %v721, %v761
      %vm765 = vcmp.eq.s32.totalorder %v724, %v761
      %vm766 = vcmp.eq.s32.totalorder %v727, %v761
      %vm767 = vcmp.eq.s32.totalorder %v730, %v761
      %vm768 = vcmp.eq.s32.totalorder %v733, %v761
      %vm769 = vcmp.eq.s32.totalorder %v736, %v761
      %vm770 = vcmp.eq.s32.totalorder %v739, %v761
      %vm771 = vcmp.eq.s32.totalorder %v742, %v761
      %vm772 = vcmp.eq.s32.totalorder %v745, %v761
      %vm773 = vcmp.eq.s32.totalorder %v748, %v761
      %vm774 = vcmp.eq.s32.totalorder %v751, %v761
      %vm775 = vcmp.eq.s32.totalorder %v754, %v761
      %vm776 = vcmp.eq.s32.totalorder %v757, %v761
      %vm777 = vcmp.eq.s32.totalorder %v760, %v761
      %vm778 = vmand %vm762, %vm680
      %vm779 = vmand %vm763, %vm681
      %vm780 = vmand %vm764, %vm682
      %vm781 = vmand %vm765, %vm683
      %vm782 = vmand %vm766, %vm684
      %vm783 = vmand %vm767, %vm685
      %vm784 = vmand %vm768, %vm686
      %vm785 = vmand %vm769, %vm687
      %vm786 = vmand %vm770, %vm688
      %vm787 = vmand %vm771, %vm689
      %vm788 = vmand %vm772, %vm690
      %vm789 = vmand %vm773, %vm691
      %vm790 = vmand %vm774, %vm692
      %vm791 = vmand %vm775, %vm693
      %vm792 = vmand %vm776, %vm694
      %vm793 = vmand %vm777, %vm695
      %v794 = vld [vmem:[#allocation5] sm:$0xff]
      %v795 = vld [vmem:[#allocation5 + $0x8] sm:$0xff]
      %v796 = vld [vmem:[#allocation5 + $0x10] sm:$0xff]
      %v797 = vld [vmem:[#allocation5 + $0x18] sm:$0xff]
      %v798 = vld [vmem:[#allocation5 + $0x20] sm:$0xff]
      %v799 = vld [vmem:[#allocation5 + $0x28] sm:$0xff]
      %v800 = vld [vmem:[#allocation5 + $0x30] sm:$0xff]
      %v801 = vld [vmem:[#allocation5 + $0x38] sm:$0xff]
      %v802 = vld [vmem:[#allocation5 + $0x40] sm:$0xff]
      %v803 = vld [vmem:[#allocation5 + $0x48] sm:$0xff]
      %v804 = vld [vmem:[#allocation5 + $0x50] sm:$0xff]
      %v805 = vld [vmem:[#allocation5 + $0x58] sm:$0xff]
      %v806 = vld [vmem:[#allocation5 + $0x60] sm:$0xff]
      %v807 = vld [vmem:[#allocation5 + $0x68] sm:$0xff]
      %v808 = vld [vmem:[#allocation5 + $0x70] sm:$0xff]
      %v809 = vld [vmem:[#allocation5 + $0x78] sm:$0xff]
      %v810 = vsel %vm762, 1, 0
      %v811 = vsel %vm763, 1, 0
      %v812 = vsel %vm764, 1, 0
      %v813 = vsel %vm765, 1, 0
      %v814 = vsel %vm766, 1, 0
      %v815 = vsel %vm767, 1, 0
      %v816 = vsel %vm768, 1, 0
      %v817 = vsel %vm769, 1, 0
      %v818 = vsel %vm770, 1, 0
      %v819 = vsel %vm771, 1, 0
      %v820 = vsel %vm772, 1, 0
      %v821 = vsel %vm773, 1, 0
      %v822 = vsel %vm774, 1, 0
      %v823 = vsel %vm775, 1, 0
      %v824 = vsel %vm776, 1, 0
      %v825 = vsel %vm777, 1, 0
      %v826 = vcvt.s32.f32 %v810
      %v827 = vcvt.s32.f32 %v811
      %v828 = vcvt.s32.f32 %v812
      %v829 = vcvt.s32.f32 %v813
      %v830 = vcvt.s32.f32 %v814
      %v831 = vcvt.s32.f32 %v815
      %v832 = vcvt.s32.f32 %v816
      %v833 = vcvt.s32.f32 %v817
      %v834 = vcvt.s32.f32 %v818
      %v835 = vcvt.s32.f32 %v819
      %v836 = vcvt.s32.f32 %v820
      %v837 = vcvt.s32.f32 %v821
      %v838 = vcvt.s32.f32 %v822
      %v839 = vcvt.s32.f32 %v823
      %v840 = vcvt.s32.f32 %v824
      %v841 = vcvt.s32.f32 %v825
      %842 = vadd.xlane.f32.xlu0 %v826
      %v843 = vpop.xlane.xlu0 %842
      %844 = vadd.xlane.f32.xlu0 %v827
      %v845 = vpop.xlane.xlu0 %844
      %846 = vadd.xlane.f32.xlu0 %v828
      %v847 = vpop.xlane.xlu0 %846
      %848 = vadd.xlane.f32.xlu0 %v829
      %v849 = vpop.xlane.xlu0 %848
      %850 = vadd.xlane.f32.xlu0 %v830
      %v851 = vpop.xlane.xlu0 %850
      %852 = vadd.xlane.f32.xlu0 %v831
      %v853 = vpop.xlane.xlu0 %852
      %854 = vadd.xlane.f32.xlu0 %v832
      %v855 = vpop.xlane.xlu0 %854
      %856 = vadd.xlane.f32.xlu0 %v833
      %v857 = vpop.xlane.xlu0 %856
      %858 = vadd.xlane.f32.xlu0 %v834
      %v859 = vpop.xlane.xlu0 %858
      %860 = vadd.xlane.f32.xlu0 %v835
      %v861 = vpop.xlane.xlu0 %860
      %862 = vadd.xlane.f32.xlu0 %v836
      %v863 = vpop.xlane.xlu0 %862
      %864 = vadd.xlane.f32.xlu0 %v837
      %v865 = vpop.xlane.xlu0 %864
      %866 = vadd.xlane.f32.xlu0 %v838
      %v867 = vpop.xlane.xlu0 %866
      %868 = vadd.xlane.f32.xlu0 %v839
      %v869 = vpop.xlane.xlu0 %868
      %870 = vadd.xlane.f32.xlu0 %v840
      %v871 = vpop.xlane.xlu0 %870
      %872 = vadd.xlane.f32.xlu0 %v841
      %v873 = vpop.xlane.xlu0 %872
      %v874 = vadd.f32 %v794, %v843
      %v875 = vadd.f32 %v795, %v845
      %v876 = vadd.f32 %v796, %v847
      %v877 = vadd.f32 %v797, %v849
      %v878 = vadd.f32 %v798, %v851
      %v879 = vadd.f32 %v799, %v853
      %v880 = vadd.f32 %v800, %v855
      %v881 = vadd.f32 %v801, %v857
      %v882 = vadd.f32 %v802, %v859
      %v883 = vadd.f32 %v803, %v861
      %v884 = vadd.f32 %v804, %v863
      %v885 = vadd.f32 %v805, %v865
      %v886 = vadd.f32 %v806, %v867
      %v887 = vadd.f32 %v807, %v869
      %v888 = vadd.f32 %v808, %v871
      %v889 = vadd.f32 %v809, %v873
      %vm890 = vcmask 7168
      %891 = vst.msk [vmem:[#allocation5] sm:$0xff] %vm890, %v874
      %892 = vst.msk [vmem:[#allocation5 + $0x8] sm:$0xff] %vm890, %v875
      %893 = vst.msk [vmem:[#allocation5 + $0x10] sm:$0xff] %vm890, %v876
      %894 = vst.msk [vmem:[#allocation5 + $0x18] sm:$0xff] %vm890, %v877
      %895 = vst.msk [vmem:[#allocation5 + $0x20] sm:$0xff] %vm890, %v878
      %896 = vst.msk [vmem:[#allocation5 + $0x28] sm:$0xff] %vm890, %v879
      %897 = vst.msk [vmem:[#allocation5 + $0x30] sm:$0xff] %vm890, %v880
      %898 = vst.msk [vmem:[#allocation5 + $0x38] sm:$0xff] %vm890, %v881
      %899 = vst.msk [vmem:[#allocation5 + $0x40] sm:$0xff] %vm890, %v882
      %900 = vst.msk [vmem:[#allocation5 + $0x48] sm:$0xff] %vm890, %v883
      %901 = vst.msk [vmem:[#allocation5 + $0x50] sm:$0xff] %vm890, %v884
      %902 = vst.msk [vmem:[#allocation5 + $0x58] sm:$0xff] %vm890, %v885
      %903 = vst.msk [vmem:[#allocation5 + $0x60] sm:$0xff] %vm890, %v886
      %904 = vst.msk [vmem:[#allocation5 + $0x68] sm:$0xff] %vm890, %v887
      %905 = vst.msk [vmem:[#allocation5 + $0x70] sm:$0xff] %vm890, %v888
      %906 = vst.msk [vmem:[#allocation5 + $0x78] sm:$0xff] %vm890, %v889
      %v907 = vld [vmem:[#allocation4] sm:$0xff]
      %v908 = vld [vmem:[#allocation4 + $0x8] sm:$0xff]
      %v909 = vld [vmem:[#allocation4 + $0x10] sm:$0xff]
      %v910 = vld [vmem:[#allocation4 + $0x18] sm:$0xff]
      %v911 = vld [vmem:[#allocation4 + $0x20] sm:$0xff]
      %v912 = vld [vmem:[#allocation4 + $0x28] sm:$0xff]
      %v913 = vld [vmem:[#allocation4 + $0x30] sm:$0xff]
      %v914 = vld [vmem:[#allocation4 + $0x38] sm:$0xff]
      %v915 = vld [vmem:[#allocation4 + $0x40] sm:$0xff]
      %v916 = vld [vmem:[#allocation4 + $0x48] sm:$0xff]
      %v917 = vld [vmem:[#allocation4 + $0x50] sm:$0xff]
      %v918 = vld [vmem:[#allocation4 + $0x58] sm:$0xff]
      %v919 = vld [vmem:[#allocation4 + $0x60] sm:$0xff]
      %v920 = vld [vmem:[#allocation4 + $0x68] sm:$0xff]
      %v921 = vld [vmem:[#allocation4 + $0x70] sm:$0xff]
      %v922 = vld [vmem:[#allocation4 + $0x78] sm:$0xff]
      %v923 = vsel %vm778, %v601, 0.0
      %v924 = vsel %vm779, %v603, 0.0
      %v925 = vsel %vm780, %v606, 0.0
      %v926 = vsel %vm781, %v608, 0.0
      %v927 = vsel %vm782, %v611, 0.0
      %v928 = vsel %vm783, %v613, 0.0
      %v929 = vsel %vm784, %v616, 0.0
      %v930 = vsel %vm785, %v618, 0.0
      %v931 = vsel %vm786, %v621, 0.0
      %v932 = vsel %vm787, %v623, 0.0
      %v933 = vsel %vm788, %v626, 0.0
      %v934 = vsel %vm789, %v628, 0.0
      %v935 = vsel %vm790, %v631, 0.0
      %v936 = vsel %vm791, %v633, 0.0
      %v937 = vsel %vm792, %v636, 0.0
      %v938 = vsel %vm793, %v638, 0.0
      %939 = vadd.xlane.f32.xlu0 %v923
      %v940 = vpop.xlane.xlu0 %939
      %941 = vadd.xlane.f32.xlu0 %v924
      %v942 = vpop.xlane.xlu0 %941
      %943 = vadd.xlane.f32.xlu0 %v925
      %v944 = vpop.xlane.xlu0 %943
      %945 = vadd.xlane.f32.xlu0 %v926
      %v946 = vpop.xlane.xlu0 %945
      %947 = vadd.xlane.f32.xlu0 %v927
      %v948 = vpop.xlane.xlu0 %947
      %949 = vadd.xlane.f32.xlu0 %v928
      %v950 = vpop.xlane.xlu0 %949
      %951 = vadd.xlane.f32.xlu0 %v929
      %v952 = vpop.xlane.xlu0 %951
      %953 = vadd.xlane.f32.xlu0 %v930
      %v954 = vpop.xlane.xlu0 %953
      %955 = vadd.xlane.f32.xlu0 %v931
      %v956 = vpop.xlane.xlu0 %955
      %957 = vadd.xlane.f32.xlu0 %v932
      %v958 = vpop.xlane.xlu0 %957
      %959 = vadd.xlane.f32.xlu0 %v933
      %v960 = vpop.xlane.xlu0 %959
      %961 = vadd.xlane.f32.xlu0 %v934
      %v962 = vpop.xlane.xlu0 %961
      %963 = vadd.xlane.f32.xlu0 %v935
      %v964 = vpop.xlane.xlu0 %963
      %965 = vadd.xlane.f32.xlu0 %v936
      %v966 = vpop.xlane.xlu0 %965
      %967 = vadd.xlane.f32.xlu0 %v937
      %v968 = vpop.xlane.xlu0 %967
      %969 = vadd.xlane.f32.xlu0 %v938
      %v970 = vpop.xlane.xlu0 %969
      %v971 = vadd.f32 %v907, %v940
      %v972 = vadd.f32 %v908, %v942
      %v973 = vadd.f32 %v909, %v944
      %v974 = vadd.f32 %v910, %v946
      %v975 = vadd.f32 %v911, %v948
      %v976 = vadd.f32 %v912, %v950
      %v977 = vadd.f32 %v913, %v952
      %v978 = vadd.f32 %v914, %v954
      %v979 = vadd.f32 %v915, %v956
      %v980 = vadd.f32 %v916, %v958
      %v981 = vadd.f32 %v917, %v960
      %v982 = vadd.f32 %v918, %v962
      %v983 = vadd.f32 %v919, %v964
      %v984 = vadd.f32 %v920, %v966
      %v985 = vadd.f32 %v921, %v968
      %v986 = vadd.f32 %v922, %v970
      %987 = vst.msk [vmem:[#allocation4] sm:$0xff] %vm890, %v971
      %988 = vst.msk [vmem:[#allocation4 + $0x8] sm:$0xff] %vm890, %v972
      %989 = vst.msk [vmem:[#allocation4 + $0x10] sm:$0xff] %vm890, %v973
      %990 = vst.msk [vmem:[#allocation4 + $0x18] sm:$0xff] %vm890, %v974
      %991 = vst.msk [vmem:[#allocation4 + $0x20] sm:$0xff] %vm890, %v975
      %992 = vst.msk [vmem:[#allocation4 + $0x28] sm:$0xff] %vm890, %v976
      %993 = vst.msk [vmem:[#allocation4 + $0x30] sm:$0xff] %vm890, %v977
      %994 = vst.msk [vmem:[#allocation4 + $0x38] sm:$0xff] %vm890, %v978
      %995 = vst.msk [vmem:[#allocation4 + $0x40] sm:$0xff] %vm890, %v979
      %996 = vst.msk [vmem:[#allocation4 + $0x48] sm:$0xff] %vm890, %v980
      %997 = vst.msk [vmem:[#allocation4 + $0x50] sm:$0xff] %vm890, %v981
      %998 = vst.msk [vmem:[#allocation4 + $0x58] sm:$0xff] %vm890, %v982
      %999 = vst.msk [vmem:[#allocation4 + $0x60] sm:$0xff] %vm890, %v983
      %1000 = vst.msk [vmem:[#allocation4 + $0x68] sm:$0xff] %vm890, %v984
      %1001 = vst.msk [vmem:[#allocation4 + $0x70] sm:$0xff] %vm890, %v985
      %1002 = vst.msk [vmem:[#allocation4 + $0x78] sm:$0xff] %vm890, %v986
      %v1003 = vsel %vm680, %v601, -1e+30
      %v1004 = vsel %vm681, %v603, -1e+30
      %v1005 = vsel %vm682, %v606, -1e+30
      %v1006 = vsel %vm683, %v608, -1e+30
      %v1007 = vsel %vm684, %v611, -1e+30
      %v1008 = vsel %vm685, %v613, -1e+30
      %v1009 = vsel %vm686, %v616, -1e+30
      %v1010 = vsel %vm687, %v618, -1e+30
      %v1011 = vsel %vm688, %v621, -1e+30
      %v1012 = vsel %vm689, %v623, -1e+30
      %v1013 = vsel %vm690, %v626, -1e+30
      %v1014 = vsel %vm691, %v628, -1e+30
      %v1015 = vsel %vm692, %v631, -1e+30
      %v1016 = vsel %vm693, %v633, -1e+30
      %v1017 = vsel %vm694, %v636, -1e+30
      %v1018 = vsel %vm695, %v638, -1e+30
      %1019 = vmax.xlane.f32.xlu0 %v1003
      %v1020 = vpop.xlane.xlu0 %1019
      %1021 = vmax.xlane.f32.xlu0 %v1004
      %v1022 = vpop.xlane.xlu0 %1021
      %1023 = vmax.xlane.f32.xlu0 %v1005
      %v1024 = vpop.xlane.xlu0 %1023
      %1025 = vmax.xlane.f32.xlu0 %v1006
      %v1026 = vpop.xlane.xlu0 %1025
      %1027 = vmax.xlane.f32.xlu0 %v1007
      %v1028 = vpop.xlane.xlu0 %1027
      %1029 = vmax.xlane.f32.xlu0 %v1008
      %v1030 = vpop.xlane.xlu0 %1029
      %1031 = vmax.xlane.f32.xlu0 %v1009
      %v1032 = vpop.xlane.xlu0 %1031
      %1033 = vmax.xlane.f32.xlu0 %v1010
      %v1034 = vpop.xlane.xlu0 %1033
      %1035 = vmax.xlane.f32.xlu0 %v1011
      %v1036 = vpop.xlane.xlu0 %1035
      %1037 = vmax.xlane.f32.xlu0 %v1012
      %v1038 = vpop.xlane.xlu0 %1037
      %1039 = vmax.xlane.f32.xlu0 %v1013
      %v1040 = vpop.xlane.xlu0 %1039
      %1041 = vmax.xlane.f32.xlu0 %v1014
      %v1042 = vpop.xlane.xlu0 %1041
      %1043 = vmax.xlane.f32.xlu0 %v1015
      %v1044 = vpop.xlane.xlu0 %1043
      %1045 = vmax.xlane.f32.xlu0 %v1016
      %v1046 = vpop.xlane.xlu0 %1045
      %1047 = vmax.xlane.f32.xlu0 %v1017
      %v1048 = vpop.xlane.xlu0 %1047
      %1049 = vmax.xlane.f32.xlu0 %v1018
      %v1050 = vpop.xlane.xlu0 %1049
      %v1051 = vld [vmem:[#allocation2] sm:$0xff]
      %v1052 = vld [vmem:[#allocation2 + $0x8] sm:$0xff]
      %v1053 = vld [vmem:[#allocation2 + $0x10] sm:$0xff]
      %v1054 = vld [vmem:[#allocation2 + $0x18] sm:$0xff]
      %v1055 = vld [vmem:[#allocation2 + $0x20] sm:$0xff]
      %v1056 = vld [vmem:[#allocation2 + $0x28] sm:$0xff]
      %v1057 = vld [vmem:[#allocation2 + $0x30] sm:$0xff]
      %v1058 = vld [vmem:[#allocation2 + $0x38] sm:$0xff]
      %v1059 = vld [vmem:[#allocation2 + $0x40] sm:$0xff]
      %v1060 = vld [vmem:[#allocation2 + $0x48] sm:$0xff]
      %v1061 = vld [vmem:[#allocation2 + $0x50] sm:$0xff]
      %v1062 = vld [vmem:[#allocation2 + $0x58] sm:$0xff]
      %v1063 = vld [vmem:[#allocation2 + $0x60] sm:$0xff]
      %v1064 = vld [vmem:[#allocation2 + $0x68] sm:$0xff]
      %v1065 = vld [vmem:[#allocation2 + $0x70] sm:$0xff]
      %v1066 = vld [vmem:[#allocation2 + $0x78] sm:$0xff]
      %v1067 = vmax.f32 %v1051, %v1020
      %v1068 = vmax.f32 %v1052, %v1022
      %v1069 = vmax.f32 %v1053, %v1024
      %v1070 = vmax.f32 %v1054, %v1026
      %v1071 = vmax.f32 %v1055, %v1028
      %v1072 = vmax.f32 %v1056, %v1030
      %v1073 = vmax.f32 %v1057, %v1032
      %v1074 = vmax.f32 %v1058, %v1034
      %v1075 = vmax.f32 %v1059, %v1036
      %v1076 = vmax.f32 %v1060, %v1038
      %v1077 = vmax.f32 %v1061, %v1040
      %v1078 = vmax.f32 %v1062, %v1042
      %v1079 = vmax.f32 %v1063, %v1044
      %v1080 = vmax.f32 %v1064, %v1046
      %v1081 = vmax.f32 %v1065, %v1048
      %v1082 = vmax.f32 %v1066, %v1050
      %1084 = vset.pattern.permute.xlu0 0
      %1085 = vperm.xlu0 %1084, %v1067
      %v1086 = vpop.permute.xlu0 %1085
      %1089 = vset.pattern.permute.xlu0 0
      %1090 = vperm.xlu0 %1089, %v1068
      %v1091 = vpop.permute.xlu0 %1090
      %1094 = vset.pattern.permute.xlu0 0
      %1095 = vperm.xlu0 %1094, %v1069
      %v1096 = vpop.permute.xlu0 %1095
      %1099 = vset.pattern.permute.xlu0 0
      %1100 = vperm.xlu0 %1099, %v1070
      %v1101 = vpop.permute.xlu0 %1100
      %1104 = vset.pattern.permute.xlu0 0
      %1105 = vperm.xlu0 %1104, %v1071
      %v1106 = vpop.permute.xlu0 %1105
      %1109 = vset.pattern.permute.xlu0 0
      %1110 = vperm.xlu0 %1109, %v1072
      %v1111 = vpop.permute.xlu0 %1110
      %1114 = vset.pattern.permute.xlu0 0
      %1115 = vperm.xlu0 %1114, %v1073
      %v1116 = vpop.permute.xlu0 %1115
      %1119 = vset.pattern.permute.xlu0 0
      %1120 = vperm.xlu0 %1119, %v1074
      %v1121 = vpop.permute.xlu0 %1120
      %1124 = vset.pattern.permute.xlu0 0
      %1125 = vperm.xlu0 %1124, %v1075
      %v1126 = vpop.permute.xlu0 %1125
      %1129 = vset.pattern.permute.xlu0 0
      %1130 = vperm.xlu0 %1129, %v1076
      %v1131 = vpop.permute.xlu0 %1130
      %1134 = vset.pattern.permute.xlu0 0
      %1135 = vperm.xlu0 %1134, %v1077
      %v1136 = vpop.permute.xlu0 %1135
      %1139 = vset.pattern.permute.xlu0 0
      %1140 = vperm.xlu0 %1139, %v1078
      %v1141 = vpop.permute.xlu0 %1140
      %1144 = vset.pattern.permute.xlu0 0
      %1145 = vperm.xlu0 %1144, %v1079
      %v1146 = vpop.permute.xlu0 %1145
      %1149 = vset.pattern.permute.xlu0 0
      %1150 = vperm.xlu0 %1149, %v1080
      %v1151 = vpop.permute.xlu0 %1150
      %1154 = vset.pattern.permute.xlu0 0
      %1155 = vperm.xlu0 %1154, %v1081
      %v1156 = vpop.permute.xlu0 %1155
      %1159 = vset.pattern.permute.xlu0 0
      %1160 = vperm.xlu0 %1159, %v1082
      %v1161 = vpop.permute.xlu0 %1160
      %v1163 = vsub.f32 %v601, %v1086
      %v1164 = vsub.f32 %v603, %v1091
      %v1165 = vsub.f32 %v606, %v1096
      %v1166 = vsub.f32 %v608, %v1101
      %v1167 = vsub.f32 %v611, %v1106
      %v1168 = vsub.f32 %v613, %v1111
      %v1169 = vsub.f32 %v616, %v1116
      %v1170 = vsub.f32 %v618, %v1121
      %v1171 = vsub.f32 %v621, %v1126
      %v1172 = vsub.f32 %v623, %v1131
      %v1173 = vsub.f32 %v626, %v1136
      %v1174 = vsub.f32 %v628, %v1141
      %v1175 = vsub.f32 %v631, %v1146
      %v1176 = vsub.f32 %v633, %v1151
      %v1177 = vsub.f32 %v636, %v1156
      %v1178 = vsub.f32 %v638, %v1161
      %v1179 = vmul.f32 %v1163, 1.442695
      %v1180 = vpow.pop %v1179
      %v1181 = vmul.f32 %v1164, 1.442695
      %v1182 = vpow.pop %v1181
      %v1183 = vmul.f32 %v1165, 1.442695
      %v1184 = vpow.pop %v1183
      %v1185 = vmul.f32 %v1166, 1.442695
      %v1186 = vpow.pop %v1185
      %v1187 = vmul.f32 %v1167, 1.442695
      %v1188 = vpow.pop %v1187
      %v1189 = vmul.f32 %v1168, 1.442695
      %v1190 = vpow.pop %v1189
      %v1191 = vmul.f32 %v1169, 1.442695
      %v1192 = vpow.pop %v1191
      %v1193 = vmul.f32 %v1170, 1.442695
      %v1194 = vpow.pop %v1193
      %v1195 = vmul.f32 %v1171, 1.442695
      %v1196 = vpow.pop %v1195
      %v1197 = vmul.f32 %v1172, 1.442695
      %v1198 = vpow.pop %v1197
      %v1199 = vmul.f32 %v1173, 1.442695
      %v1200 = vpow.pop %v1199
      %v1201 = vmul.f32 %v1174, 1.442695
      %v1202 = vpow.pop %v1201
      %v1203 = vmul.f32 %v1175, 1.442695
      %v1204 = vpow.pop %v1203
      %v1205 = vmul.f32 %v1176, 1.442695
      %v1206 = vpow.pop %v1205
      %v1207 = vmul.f32 %v1177, 1.442695
      %v1208 = vpow.pop %v1207
      %v1209 = vmul.f32 %v1178, 1.442695
      %v1210 = vpow.pop %v1209
      %v1211 = vsel %vm680, %v1180, 0.0
      %v1212 = vsel %vm681, %v1182, 0.0
      %v1213 = vsel %vm682, %v1184, 0.0
      %v1214 = vsel %vm683, %v1186, 0.0
      %v1215 = vsel %vm684, %v1188, 0.0
      %v1216 = vsel %vm685, %v1190, 0.0
      %v1217 = vsel %vm686, %v1192, 0.0
      %v1218 = vsel %vm687, %v1194, 0.0
      %v1219 = vsel %vm688, %v1196, 0.0
      %v1220 = vsel %vm689, %v1198, 0.0
      %v1221 = vsel %vm690, %v1200, 0.0
      %v1222 = vsel %vm691, %v1202, 0.0
      %v1223 = vsel %vm692, %v1204, 0.0
      %v1224 = vsel %vm693, %v1206, 0.0
      %v1225 = vsel %vm694, %v1208, 0.0
      %v1226 = vsel %vm695, %v1210, 0.0
      %v1227 = vld [vmem:[#allocation3] sm:$0xff]
      %v1228 = vld [vmem:[#allocation3 + $0x8] sm:$0xff]
      %v1229 = vld [vmem:[#allocation3 + $0x10] sm:$0xff]
      %v1230 = vld [vmem:[#allocation3 + $0x18] sm:$0xff]
      %v1231 = vld [vmem:[#allocation3 + $0x20] sm:$0xff]
      %v1232 = vld [vmem:[#allocation3 + $0x28] sm:$0xff]
      %v1233 = vld [vmem:[#allocation3 + $0x30] sm:$0xff]
      %v1234 = vld [vmem:[#allocation3 + $0x38] sm:$0xff]
      %v1235 = vld [vmem:[#allocation3 + $0x40] sm:$0xff]
      %v1236 = vld [vmem:[#allocation3 + $0x48] sm:$0xff]
      %v1237 = vld [vmem:[#allocation3 + $0x50] sm:$0xff]
      %v1238 = vld [vmem:[#allocation3 + $0x58] sm:$0xff]
      %v1239 = vld [vmem:[#allocation3 + $0x60] sm:$0xff]
      %v1240 = vld [vmem:[#allocation3 + $0x68] sm:$0xff]
      %v1241 = vld [vmem:[#allocation3 + $0x70] sm:$0xff]
      %v1242 = vld [vmem:[#allocation3 + $0x78] sm:$0xff]
      %v1243 = vsub.f32 %v1051, %v1067
      %v1244 = vsub.f32 %v1052, %v1068
      %v1245 = vsub.f32 %v1053, %v1069
      %v1246 = vsub.f32 %v1054, %v1070
      %v1247 = vsub.f32 %v1055, %v1071
      %v1248 = vsub.f32 %v1056, %v1072
      %v1249 = vsub.f32 %v1057, %v1073
      %v1250 = vsub.f32 %v1058, %v1074
      %v1251 = vsub.f32 %v1059, %v1075
      %v1252 = vsub.f32 %v1060, %v1076
      %v1253 = vsub.f32 %v1061, %v1077
      %v1254 = vsub.f32 %v1062, %v1078
      %v1255 = vsub.f32 %v1063, %v1079
      %v1256 = vsub.f32 %v1064, %v1080
      %v1257 = vsub.f32 %v1065, %v1081
      %v1258 = vsub.f32 %v1066, %v1082
      %v1259 = vmul.f32 %v1243, 1.442695
      %v1260 = vpow.pop %v1259
      %v1261 = vmul.f32 %v1244, 1.442695
      %v1262 = vpow.pop %v1261
      %v1263 = vmul.f32 %v1245, 1.442695
      %v1264 = vpow.pop %v1263
      %v1265 = vmul.f32 %v1246, 1.442695
      %v1266 = vpow.pop %v1265
      %v1267 = vmul.f32 %v1247, 1.442695
      %v1268 = vpow.pop %v1267
      %v1269 = vmul.f32 %v1248, 1.442695
      %v1270 = vpow.pop %v1269
      %v1271 = vmul.f32 %v1249, 1.442695
      %v1272 = vpow.pop %v1271
      %v1273 = vmul.f32 %v1250, 1.442695
      %v1274 = vpow.pop %v1273
      %v1275 = vmul.f32 %v1251, 1.442695
      %v1276 = vpow.pop %v1275
      %v1277 = vmul.f32 %v1252, 1.442695
      %v1278 = vpow.pop %v1277
      %v1279 = vmul.f32 %v1253, 1.442695
      %v1280 = vpow.pop %v1279
      %v1281 = vmul.f32 %v1254, 1.442695
      %v1282 = vpow.pop %v1281
      %v1283 = vmul.f32 %v1255, 1.442695
      %v1284 = vpow.pop %v1283
      %v1285 = vmul.f32 %v1256, 1.442695
      %v1286 = vpow.pop %v1285
      %v1287 = vmul.f32 %v1257, 1.442695
      %v1288 = vpow.pop %v1287
      %v1289 = vmul.f32 %v1258, 1.442695
      %v1290 = vpow.pop %v1289
      %v1291 = vmul.f32 %v1227, %v1260
      %v1292 = vmul.f32 %v1228, %v1262
      %v1293 = vmul.f32 %v1229, %v1264
      %v1294 = vmul.f32 %v1230, %v1266
      %v1295 = vmul.f32 %v1231, %v1268
      %v1296 = vmul.f32 %v1232, %v1270
      %v1297 = vmul.f32 %v1233, %v1272
      %v1298 = vmul.f32 %v1234, %v1274
      %v1299 = vmul.f32 %v1235, %v1276
      %v1300 = vmul.f32 %v1236, %v1278
      %v1301 = vmul.f32 %v1237, %v1280
      %v1302 = vmul.f32 %v1238, %v1282
      %v1303 = vmul.f32 %v1239, %v1284
      %v1304 = vmul.f32 %v1240, %v1286
      %v1305 = vmul.f32 %v1241, %v1288
      %v1306 = vmul.f32 %v1242, %v1290
      %1307 = vadd.xlane.f32.xlu0 %v1211
      %v1308 = vpop.xlane.xlu0 %1307
      %1309 = vadd.xlane.f32.xlu0 %v1212
      %v1310 = vpop.xlane.xlu0 %1309
      %1311 = vadd.xlane.f32.xlu0 %v1213
      %v1312 = vpop.xlane.xlu0 %1311
      %1313 = vadd.xlane.f32.xlu0 %v1214
      %v1314 = vpop.xlane.xlu0 %1313
      %1315 = vadd.xlane.f32.xlu0 %v1215
      %v1316 = vpop.xlane.xlu0 %1315
      %1317 = vadd.xlane.f32.xlu0 %v1216
      %v1318 = vpop.xlane.xlu0 %1317
      %1319 = vadd.xlane.f32.xlu0 %v1217
      %v1320 = vpop.xlane.xlu0 %1319
      %1321 = vadd.xlane.f32.xlu0 %v1218
      %v1322 = vpop.xlane.xlu0 %1321
      %1323 = vadd.xlane.f32.xlu0 %v1219
      %v1324 = vpop.xlane.xlu0 %1323
      %1325 = vadd.xlane.f32.xlu0 %v1220
      %v1326 = vpop.xlane.xlu0 %1325
      %1327 = vadd.xlane.f32.xlu0 %v1221
      %v1328 = vpop.xlane.xlu0 %1327
      %1329 = vadd.xlane.f32.xlu0 %v1222
      %v1330 = vpop.xlane.xlu0 %1329
      %1331 = vadd.xlane.f32.xlu0 %v1223
      %v1332 = vpop.xlane.xlu0 %1331
      %1333 = vadd.xlane.f32.xlu0 %v1224
      %v1334 = vpop.xlane.xlu0 %1333
      %1335 = vadd.xlane.f32.xlu0 %v1225
      %v1336 = vpop.xlane.xlu0 %1335
      %1337 = vadd.xlane.f32.xlu0 %v1226
      %v1338 = vpop.xlane.xlu0 %1337
      %v1339 = vadd.f32 %v1291, %v1308
      %v1340 = vadd.f32 %v1292, %v1310
      %v1341 = vadd.f32 %v1293, %v1312
      %v1342 = vadd.f32 %v1294, %v1314
      %v1343 = vadd.f32 %v1295, %v1316
      %v1344 = vadd.f32 %v1296, %v1318
      %v1345 = vadd.f32 %v1297, %v1320
      %v1346 = vadd.f32 %v1298, %v1322
      %v1347 = vadd.f32 %v1299, %v1324
      %v1348 = vadd.f32 %v1300, %v1326
      %v1349 = vadd.f32 %v1301, %v1328
      %v1350 = vadd.f32 %v1302, %v1330
      %v1351 = vadd.f32 %v1303, %v1332
      %v1352 = vadd.f32 %v1304, %v1334
      %v1353 = vadd.f32 %v1305, %v1336
      %v1354 = vadd.f32 %v1306, %v1338
      %1355 = vst.msk [vmem:[#allocation3] sm:$0xff] %vm890, %v1339
      %1356 = vst.msk [vmem:[#allocation3 + $0x8] sm:$0xff] %vm890, %v1340
      %1357 = vst.msk [vmem:[#allocation3 + $0x10] sm:$0xff] %vm890, %v1341
      %1358 = vst.msk [vmem:[#allocation3 + $0x18] sm:$0xff] %vm890, %v1342
      %1359 = vst.msk [vmem:[#allocation3 + $0x20] sm:$0xff] %vm890, %v1343
      %1360 = vst.msk [vmem:[#allocation3 + $0x28] sm:$0xff] %vm890, %v1344
      %1361 = vst.msk [vmem:[#allocation3 + $0x30] sm:$0xff] %vm890, %v1345
      %1362 = vst.msk [vmem:[#allocation3 + $0x38] sm:$0xff] %vm890, %v1346
      %1363 = vst.msk [vmem:[#allocation3 + $0x40] sm:$0xff] %vm890, %v1347
      %1364 = vst.msk [vmem:[#allocation3 + $0x48] sm:$0xff] %vm890, %v1348
      %1365 = vst.msk [vmem:[#allocation3 + $0x50] sm:$0xff] %vm890, %v1349
      %1366 = vst.msk [vmem:[#allocation3 + $0x58] sm:$0xff] %vm890, %v1350
      %1367 = vst.msk [vmem:[#allocation3 + $0x60] sm:$0xff] %vm890, %v1351
      %1368 = vst.msk [vmem:[#allocation3 + $0x68] sm:$0xff] %vm890, %v1352
      %1369 = vst.msk [vmem:[#allocation3 + $0x70] sm:$0xff] %vm890, %v1353
      %1370 = vst.msk [vmem:[#allocation3 + $0x78] sm:$0xff] %vm890, %v1354
      %1371 = vst.msk [vmem:[#allocation2] sm:$0xff] %vm890, %v1067
      %1372 = vst.msk [vmem:[#allocation2 + $0x8] sm:$0xff] %vm890, %v1068
      %1373 = vst.msk [vmem:[#allocation2 + $0x10] sm:$0xff] %vm890, %v1069
      %1374 = vst.msk [vmem:[#allocation2 + $0x18] sm:$0xff] %vm890, %v1070
      %1375 = vst.msk [vmem:[#allocation2 + $0x20] sm:$0xff] %vm890, %v1071
      %1376 = vst.msk [vmem:[#allocation2 + $0x28] sm:$0xff] %vm890, %v1072
      %1377 = vst.msk [vmem:[#allocation2 + $0x30] sm:$0xff] %vm890, %v1073
      %1378 = vst.msk [vmem:[#allocation2 + $0x38] sm:$0xff] %vm890, %v1074
      %1379 = vst.msk [vmem:[#allocation2 + $0x40] sm:$0xff] %vm890, %v1075
      %1380 = vst.msk [vmem:[#allocation2 + $0x48] sm:$0xff] %vm890, %v1076
      %1381 = vst.msk [vmem:[#allocation2 + $0x50] sm:$0xff] %vm890, %v1077
      %1382 = vst.msk [vmem:[#allocation2 + $0x58] sm:$0xff] %vm890, %v1078
      %1383 = vst.msk [vmem:[#allocation2 + $0x60] sm:$0xff] %vm890, %v1079
      %1384 = vst.msk [vmem:[#allocation2 + $0x68] sm:$0xff] %vm890, %v1080
      %1385 = vst.msk [vmem:[#allocation2 + $0x70] sm:$0xff] %vm890, %v1081
      %1386 = vst.msk [vmem:[#allocation2 + $0x78] sm:$0xff] %vm890, %v1082
      %p1387 = scmp.eq.s32.totalorder %s23, 1
      // Predicated region
      $region45: #{tpu_custom_call.1} parent=39 // pred_check
        %p1388 = pneg %p1387
      $region46: #{tpu_custom_call.1} parent=39 // pred_check_branch
        %1390 = sbr.rel (%p1388) target = $region48
      $region47: #{tpu_custom_call.1} parent=39 // pred_region
        %v1391 = vld [vmem:[#allocation2] sm:$0xff]
        %v1392 = vld [vmem:[#allocation2 + $0x8] sm:$0xff]
        %v1393 = vld [vmem:[#allocation2 + $0x10] sm:$0xff]
        %v1394 = vld [vmem:[#allocation2 + $0x18] sm:$0xff]
        %v1395 = vld [vmem:[#allocation2 + $0x20] sm:$0xff]
        %v1396 = vld [vmem:[#allocation2 + $0x28] sm:$0xff]
        %v1397 = vld [vmem:[#allocation2 + $0x30] sm:$0xff]
        %v1398 = vld [vmem:[#allocation2 + $0x38] sm:$0xff]
        %v1399 = vld [vmem:[#allocation2 + $0x40] sm:$0xff]
        %v1400 = vld [vmem:[#allocation2 + $0x48] sm:$0xff]
        %v1401 = vld [vmem:[#allocation2 + $0x50] sm:$0xff]
        %v1402 = vld [vmem:[#allocation2 + $0x58] sm:$0xff]
        %v1403 = vld [vmem:[#allocation2 + $0x60] sm:$0xff]
        %v1404 = vld [vmem:[#allocation2 + $0x68] sm:$0xff]
        %v1405 = vld [vmem:[#allocation2 + $0x70] sm:$0xff]
        %v1406 = vld [vmem:[#allocation2 + $0x78] sm:$0xff]
        %v1407 = vld [vmem:[#allocation3] sm:$0xff]
        %v1408 = vld [vmem:[#allocation3 + $0x8] sm:$0xff]
        %v1409 = vld [vmem:[#allocation3 + $0x10] sm:$0xff]
        %v1410 = vld [vmem:[#allocation3 + $0x18] sm:$0xff]
        %v1411 = vld [vmem:[#allocation3 + $0x20] sm:$0xff]
        %v1412 = vld [vmem:[#allocation3 + $0x28] sm:$0xff]
        %v1413 = vld [vmem:[#allocation3 + $0x30] sm:$0xff]
        %v1414 = vld [vmem:[#allocation3 + $0x38] sm:$0xff]
        %v1415 = vld [vmem:[#allocation3 + $0x40] sm:$0xff]
        %v1416 = vld [vmem:[#allocation3 + $0x48] sm:$0xff]
        %v1417 = vld [vmem:[#allocation3 + $0x50] sm:$0xff]
        %v1418 = vld [vmem:[#allocation3 + $0x58] sm:$0xff]
        %v1419 = vld [vmem:[#allocation3 + $0x60] sm:$0xff]
        %v1420 = vld [vmem:[#allocation3 + $0x68] sm:$0xff]
        %v1421 = vld [vmem:[#allocation3 + $0x70] sm:$0xff]
        %v1422 = vld [vmem:[#allocation3 + $0x78] sm:$0xff]
        %v1423 = vlog2.pop %v1407
        %v1424 = vmul.f32 %v1423, 0.6931472
        %v1425 = vlog2.pop %v1408
        %v1426 = vmul.f32 %v1425, 0.6931472
        %v1427 = vlog2.pop %v1409
        %v1428 = vmul.f32 %v1427, 0.6931472
        %v1429 = vlog2.pop %v1410
        %v1430 = vmul.f32 %v1429, 0.6931472
        %v1431 = vlog2.pop %v1411
        %v1432 = vmul.f32 %v1431, 0.6931472
        %v1433 = vlog2.pop %v1412
        %v1434 = vmul.f32 %v1433, 0.6931472
        %v1435 = vlog2.pop %v1413
        %v1436 = vmul.f32 %v1435, 0.6931472
        %v1437 = vlog2.pop %v1414
        %v1438 = vmul.f32 %v1437, 0.6931472
        %v1439 = vlog2.pop %v1415
        %v1440 = vmul.f32 %v1439, 0.6931472
        %v1441 = vlog2.pop %v1416
        %v1442 = vmul.f32 %v1441, 0.6931472
        %v1443 = vlog2.pop %v1417
        %v1444 = vmul.f32 %v1443, 0.6931472
        %v1445 = vlog2.pop %v1418
        %v1446 = vmul.f32 %v1445, 0.6931472
        %v1447 = vlog2.pop %v1419
        %v1448 = vmul.f32 %v1447, 0.6931472
        %v1449 = vlog2.pop %v1420
        %v1450 = vmul.f32 %v1449, 0.6931472
        %v1451 = vlog2.pop %v1421
        %v1452 = vmul.f32 %v1451, 0.6931472
        %v1453 = vlog2.pop %v1422
        %v1454 = vmul.f32 %v1453, 0.6931472
        %v1455 = vadd.f32 %v1391, %v1424
        %v1456 = vadd.f32 %v1392, %v1426
        %v1457 = vadd.f32 %v1393, %v1428
        %v1458 = vadd.f32 %v1394, %v1430
        %v1459 = vadd.f32 %v1395, %v1432
        %v1460 = vadd.f32 %v1396, %v1434
        %v1461 = vadd.f32 %v1397, %v1436
        %v1462 = vadd.f32 %v1398, %v1438
        %v1463 = vadd.f32 %v1399, %v1440
        %v1464 = vadd.f32 %v1400, %v1442
        %v1465 = vadd.f32 %v1401, %v1444
        %v1466 = vadd.f32 %v1402, %v1446
        %v1467 = vadd.f32 %v1403, %v1448
        %v1468 = vadd.f32 %v1404, %v1450
        %v1469 = vadd.f32 %v1405, %v1452
        %v1470 = vadd.f32 %v1406, %v1454
        %v1471 = vld [vmem:[#allocation5] sm:$0xff]
        %v1472 = vld [vmem:[#allocation5 + $0x8] sm:$0xff]
        %v1473 = vld [vmem:[#allocation5 + $0x10] sm:$0xff]
        %v1474 = vld [vmem:[#allocation5 + $0x18] sm:$0xff]
        %v1475 = vld [vmem:[#allocation5 + $0x20] sm:$0xff]
        %v1476 = vld [vmem:[#allocation5 + $0x28] sm:$0xff]
        %v1477 = vld [vmem:[#allocation5 + $0x30] sm:$0xff]
        %v1478 = vld [vmem:[#allocation5 + $0x38] sm:$0xff]
        %v1479 = vld [vmem:[#allocation5 + $0x40] sm:$0xff]
        %v1480 = vld [vmem:[#allocation5 + $0x48] sm:$0xff]
        %v1481 = vld [vmem:[#allocation5 + $0x50] sm:$0xff]
        %v1482 = vld [vmem:[#allocation5 + $0x58] sm:$0xff]
        %v1483 = vld [vmem:[#allocation5 + $0x60] sm:$0xff]
        %v1484 = vld [vmem:[#allocation5 + $0x68] sm:$0xff]
        %v1485 = vld [vmem:[#allocation5 + $0x70] sm:$0xff]
        %v1486 = vld [vmem:[#allocation5 + $0x78] sm:$0xff]
        %v1487 = vld [vmem:[#allocation4] sm:$0xff]
        %v1488 = vld [vmem:[#allocation4 + $0x8] sm:$0xff]
        %v1489 = vld [vmem:[#allocation4 + $0x10] sm:$0xff]
        %v1490 = vld [vmem:[#allocation4 + $0x18] sm:$0xff]
        %v1491 = vld [vmem:[#allocation4 + $0x20] sm:$0xff]
        %v1492 = vld [vmem:[#allocation4 + $0x28] sm:$0xff]
        %v1493 = vld [vmem:[#allocation4 + $0x30] sm:$0xff]
        %v1494 = vld [vmem:[#allocation4 + $0x38] sm:$0xff]
        %v1495 = vld [vmem:[#allocation4 + $0x40] sm:$0xff]
        %v1496 = vld [vmem:[#allocation4 + $0x48] sm:$0xff]
        %v1497 = vld [vmem:[#allocation4 + $0x50] sm:$0xff]
        %v1498 = vld [vmem:[#allocation4 + $0x58] sm:$0xff]
        %v1499 = vld [vmem:[#allocation4 + $0x60] sm:$0xff]
        %v1500 = vld [vmem:[#allocation4 + $0x68] sm:$0xff]
        %v1501 = vld [vmem:[#allocation4 + $0x70] sm:$0xff]
        %v1502 = vld [vmem:[#allocation4 + $0x78] sm:$0xff]
        %v1503 = vsub.f32 %v1471, 1.0
        %v1504 = vsub.f32 %v1472, 1.0
        %v1505 = vsub.f32 %v1473, 1.0
        %v1506 = vsub.f32 %v1474, 1.0
        %v1507 = vsub.f32 %v1475, 1.0
        %v1508 = vsub.f32 %v1476, 1.0
        %v1509 = vsub.f32 %v1477, 1.0
        %v1510 = vsub.f32 %v1478, 1.0
        %v1511 = vsub.f32 %v1479, 1.0
        %v1512 = vsub.f32 %v1480, 1.0
        %v1513 = vsub.f32 %v1481, 1.0
        %v1514 = vsub.f32 %v1482, 1.0
        %v1515 = vsub.f32 %v1483, 1.0
        %v1516 = vsub.f32 %v1484, 1.0
        %v1517 = vsub.f32 %v1485, 1.0
        %v1518 = vsub.f32 %v1486, 1.0
        %v1519 = vmul.f32 %v1503, %v1455
        %v1520 = vmul.f32 %v1504, %v1456
        %v1521 = vmul.f32 %v1505, %v1457
        %v1522 = vmul.f32 %v1506, %v1458
        %v1523 = vmul.f32 %v1507, %v1459
        %v1524 = vmul.f32 %v1508, %v1460
        %v1525 = vmul.f32 %v1509, %v1461
        %v1526 = vmul.f32 %v1510, %v1462
        %v1527 = vmul.f32 %v1511, %v1463
        %v1528 = vmul.f32 %v1512, %v1464
        %v1529 = vmul.f32 %v1513, %v1465
        %v1530 = vmul.f32 %v1514, %v1466
        %v1531 = vmul.f32 %v1515, %v1467
        %v1532 = vmul.f32 %v1516, %v1468
        %v1533 = vmul.f32 %v1517, %v1469
        %v1534 = vmul.f32 %v1518, %v1470
        %v1535 = vsub.f32 %v1487, %v1519
        %v1536 = vsub.f32 %v1488, %v1520
        %v1537 = vsub.f32 %v1489, %v1521
        %v1538 = vsub.f32 %v1490, %v1522
        %v1539 = vsub.f32 %v1491, %v1523
        %v1540 = vsub.f32 %v1492, %v1524
        %v1541 = vsub.f32 %v1493, %v1525
        %v1542 = vsub.f32 %v1494, %v1526
        %v1543 = vsub.f32 %v1495, %v1527
        %v1544 = vsub.f32 %v1496, %v1528
        %v1545 = vsub.f32 %v1497, %v1529
        %v1546 = vsub.f32 %v1498, %v1530
        %v1547 = vsub.f32 %v1499, %v1531
        %v1548 = vsub.f32 %v1500, %v1532
        %v1549 = vsub.f32 %v1501, %v1533
        %v1550 = vsub.f32 %v1502, %v1534
        %v1551 = vmax.f32 %v1471, 1.0
        %v1552 = vmax.f32 %v1472, 1.0
        %v1553 = vmax.f32 %v1473, 1.0
        %v1554 = vmax.f32 %v1474, 1.0
        %v1555 = vmax.f32 %v1475, 1.0
        %v1556 = vmax.f32 %v1476, 1.0
        %v1557 = vmax.f32 %v1477, 1.0
        %v1558 = vmax.f32 %v1478, 1.0
        %v1559 = vmax.f32 %v1479, 1.0
        %v1560 = vmax.f32 %v1480, 1.0
        %v1561 = vmax.f32 %v1481, 1.0
        %v1562 = vmax.f32 %v1482, 1.0
        %v1563 = vmax.f32 %v1483, 1.0
        %v1564 = vmax.f32 %v1484, 1.0
        %v1565 = vmax.f32 %v1485, 1.0
        %v1566 = vmax.f32 %v1486, 1.0
        %v1567 = vrcp.pop %v1551
        %v1568 = vmul.f32 %v1551, %v1567
        %v1569 = vsub.f32 1.0, %v1568
        %v1570 = vmul.f32 %v1567, %v1569
        %v1571 = vadd.f32 %v1567, %v1570
        %vm1572 = vweird.f32 %v1551
        %vm1573 = vweird.f32 %v1567
        %vm1574 = vmor %vm1572, %vm1573
        %v1575 = vsel %vm1574, %v1567, %v1571
        %v1576 = vand.u32 2147483647, %v1551
        %vm1577 = vcmp.eq.f32.partialorder %v1576, 8.507059e+37
        %v1578 = vand.u32 %v1551, 2147483648
        %v1579 = vor.u32 1.1754944e-38, %v1578
        %v1580 = vsel %vm1577, %v1579, %v1575
        %v1581 = vmul.f32 %v1535, %v1580
        %v1582 = vrcp.pop %v1552
        %v1583 = vmul.f32 %v1552, %v1582
        %v1584 = vsub.f32 1.0, %v1583
        %v1585 = vmul.f32 %v1582, %v1584
        %v1586 = vadd.f32 %v1582, %v1585
        %vm1587 = vweird.f32 %v1552
        %vm1588 = vweird.f32 %v1582
        %vm1589 = vmor %vm1587, %vm1588
        %v1590 = vsel %vm1589, %v1582, %v1586
        %v1591 = vand.u32 2147483647, %v1552
        %vm1592 = vcmp.eq.f32.partialorder %v1591, 8.507059e+37
        %v1593 = vand.u32 %v1552, 2147483648
        %v1594 = vor.u32 1.1754944e-38, %v1593
        %v1595 = vsel %vm1592, %v1594, %v1590
        %v1596 = vmul.f32 %v1536, %v1595
        %v1597 = vrcp.pop %v1553
        %v1598 = vmul.f32 %v1553, %v1597
        %v1599 = vsub.f32 1.0, %v1598
        %v1600 = vmul.f32 %v1597, %v1599
        %v1601 = vadd.f32 %v1597, %v1600
        %vm1602 = vweird.f32 %v1553
        %vm1603 = vweird.f32 %v1597
        %vm1604 = vmor %vm1602, %vm1603
        %v1605 = vsel %vm1604, %v1597, %v1601
        %v1606 = vand.u32 2147483647, %v1553
        %vm1607 = vcmp.eq.f32.partialorder %v1606, 8.507059e+37
        %v1608 = vand.u32 %v1553, 2147483648
        %v1609 = vor.u32 1.1754944e-38, %v1608
        %v1610 = vsel %vm1607, %v1609, %v1605
        %v1611 = vmul.f32 %v1537, %v1610
        %v1612 = vrcp.pop %v1554
        %v1613 = vmul.f32 %v1554, %v1612
        %v1614 = vsub.f32 1.0, %v1613
        %v1615 = vmul.f32 %v1612, %v1614
        %v1616 = vadd.f32 %v1612, %v1615
        %vm1617 = vweird.f32 %v1554
        %vm1618 = vweird.f32 %v1612
        %vm1619 = vmor %vm1617, %vm1618
        %v1620 = vsel %vm1619, %v1612, %v1616
        %v1621 = vand.u32 2147483647, %v1554
        %vm1622 = vcmp.eq.f32.partialorder %v1621, 8.507059e+37
        %v1623 = vand.u32 %v1554, 2147483648
        %v1624 = vor.u32 1.1754944e-38, %v1623
        %v1625 = vsel %vm1622, %v1624, %v1620
        %v1626 = vmul.f32 %v1538, %v1625
        %v1627 = vrcp.pop %v1555
        %v1628 = vmul.f32 %v1555, %v1627
        %v1629 = vsub.f32 1.0, %v1628
        %v1630 = vmul.f32 %v1627, %v1629
        %v1631 = vadd.f32 %v1627, %v1630
        %vm1632 = vweird.f32 %v1555
        %vm1633 = vweird.f32 %v1627
        %vm1634 = vmor %vm1632, %vm1633
        %v1635 = vsel %vm1634, %v1627, %v1631
        %v1636 = vand.u32 2147483647, %v1555
        %vm1637 = vcmp.eq.f32.partialorder %v1636, 8.507059e+37
        %v1638 = vand.u32 %v1555, 2147483648
        %v1639 = vor.u32 1.1754944e-38, %v1638
        %v1640 = vsel %vm1637, %v1639, %v1635
        %v1641 = vmul.f32 %v1539, %v1640
        %v1642 = vrcp.pop %v1556
        %v1643 = vmul.f32 %v1556, %v1642
        %v1644 = vsub.f32 1.0, %v1643
        %v1645 = vmul.f32 %v1642, %v1644
        %v1646 = vadd.f32 %v1642, %v1645
        %vm1647 = vweird.f32 %v1556
        %vm1648 = vweird.f32 %v1642
        %vm1649 = vmor %vm1647, %vm1648
        %v1650 = vsel %vm1649, %v1642, %v1646
        %v1651 = vand.u32 2147483647, %v1556
        %vm1652 = vcmp.eq.f32.partialorder %v1651, 8.507059e+37
        %v1653 = vand.u32 %v1556, 2147483648
        %v1654 = vor.u32 1.1754944e-38, %v1653
        %v1655 = vsel %vm1652, %v1654, %v1650
        %v1656 = vmul.f32 %v1540, %v1655
        %v1657 = vrcp.pop %v1557
        %v1658 = vmul.f32 %v1557, %v1657
        %v1659 = vsub.f32 1.0, %v1658
        %v1660 = vmul.f32 %v1657, %v1659
        %v1661 = vadd.f32 %v1657, %v1660
        %vm1662 = vweird.f32 %v1557
        %vm1663 = vweird.f32 %v1657
        %vm1664 = vmor %vm1662, %vm1663
        %v1665 = vsel %vm1664, %v1657, %v1661
        %v1666 = vand.u32 2147483647, %v1557
        %vm1667 = vcmp.eq.f32.partialorder %v1666, 8.507059e+37
        %v1668 = vand.u32 %v1557, 2147483648
        %v1669 = vor.u32 1.1754944e-38, %v1668
        %v1670 = vsel %vm1667, %v1669, %v1665
        %v1671 = vmul.f32 %v1541, %v1670
        %v1672 = vrcp.pop %v1558
        %v1673 = vmul.f32 %v1558, %v1672
        %v1674 = vsub.f32 1.0, %v1673
        %v1675 = vmul.f32 %v1672, %v1674
        %v1676 = vadd.f32 %v1672, %v1675
        %vm1677 = vweird.f32 %v1558
        %vm1678 = vweird.f32 %v1672
        %vm1679 = vmor %vm1677, %vm1678
        %v1680 = vsel %vm1679, %v1672, %v1676
        %v1681 = vand.u32 2147483647, %v1558
        %vm1682 = vcmp.eq.f32.partialorder %v1681, 8.507059e+37
        %v1683 = vand.u32 %v1558, 2147483648
        %v1684 = vor.u32 1.1754944e-38, %v1683
        %v1685 = vsel %vm1682, %v1684, %v1680
        %v1686 = vmul.f32 %v1542, %v1685
        %v1687 = vrcp.pop %v1559
        %v1688 = vmul.f32 %v1559, %v1687
        %v1689 = vsub.f32 1.0, %v1688
        %v1690 = vmul.f32 %v1687, %v1689
        %v1691 = vadd.f32 %v1687, %v1690
        %vm1692 = vweird.f32 %v1559
        %vm1693 = vweird.f32 %v1687
        %vm1694 = vmor %vm1692, %vm1693
        %v1695 = vsel %vm1694, %v1687, %v1691
        %v1696 = vand.u32 2147483647, %v1559
        %vm1697 = vcmp.eq.f32.partialorder %v1696, 8.507059e+37
        %v1698 = vand.u32 %v1559, 2147483648
        %v1699 = vor.u32 1.1754944e-38, %v1698
        %v1700 = vsel %vm1697, %v1699, %v1695
        %v1701 = vmul.f32 %v1543, %v1700
        %v1702 = vrcp.pop %v1560
        %v1703 = vmul.f32 %v1560, %v1702
        %v1704 = vsub.f32 1.0, %v1703
        %v1705 = vmul.f32 %v1702, %v1704
        %v1706 = vadd.f32 %v1702, %v1705
        %vm1707 = vweird.f32 %v1560
        %vm1708 = vweird.f32 %v1702
        %vm1709 = vmor %vm1707, %vm1708
        %v1710 = vsel %vm1709, %v1702, %v1706
        %v1711 = vand.u32 2147483647, %v1560
        %vm1712 = vcmp.eq.f32.partialorder %v1711, 8.507059e+37
        %v1713 = vand.u32 %v1560, 2147483648
        %v1714 = vor.u32 1.1754944e-38, %v1713
        %v1715 = vsel %vm1712, %v1714, %v1710
        %v1716 = vmul.f32 %v1544, %v1715
        %v1717 = vrcp.pop %v1561
        %v1718 = vmul.f32 %v1561, %v1717
        %v1719 = vsub.f32 1.0, %v1718
        %v1720 = vmul.f32 %v1717, %v1719
        %v1721 = vadd.f32 %v1717, %v1720
        %vm1722 = vweird.f32 %v1561
        %vm1723 = vweird.f32 %v1717
        %vm1724 = vmor %vm1722, %vm1723
        %v1725 = vsel %vm1724, %v1717, %v1721
        %v1726 = vand.u32 2147483647, %v1561
        %vm1727 = vcmp.eq.f32.partialorder %v1726, 8.507059e+37
        %v1728 = vand.u32 %v1561, 2147483648
        %v1729 = vor.u32 1.1754944e-38, %v1728
        %v1730 = vsel %vm1727, %v1729, %v1725
        %v1731 = vmul.f32 %v1545, %v1730
        %v1732 = vrcp.pop %v1562
        %v1733 = vmul.f32 %v1562, %v1732
        %v1734 = vsub.f32 1.0, %v1733
        %v1735 = vmul.f32 %v1732, %v1734
        %v1736 = vadd.f32 %v1732, %v1735
        %vm1737 = vweird.f32 %v1562
        %vm1738 = vweird.f32 %v1732
        %vm1739 = vmor %vm1737, %vm1738
        %v1740 = vsel %vm1739, %v1732, %v1736
        %v1741 = vand.u32 2147483647, %v1562
        %vm1742 = vcmp.eq.f32.partialorder %v1741, 8.507059e+37
        %v1743 = vand.u32 %v1562, 2147483648
        %v1744 = vor.u32 1.1754944e-38, %v1743
        %v1745 = vsel %vm1742, %v1744, %v1740
        %v1746 = vmul.f32 %v1546, %v1745
        %v1747 = vrcp.pop %v1563
        %v1748 = vmul.f32 %v1563, %v1747
        %v1749 = vsub.f32 1.0, %v1748
        %v1750 = vmul.f32 %v1747, %v1749
        %v1751 = vadd.f32 %v1747, %v1750
        %vm1752 = vweird.f32 %v1563
        %vm1753 = vweird.f32 %v1747
        %vm1754 = vmor %vm1752, %vm1753
        %v1755 = vsel %vm1754, %v1747, %v1751
        %v1756 = vand.u32 2147483647, %v1563
        %vm1757 = vcmp.eq.f32.partialorder %v1756, 8.507059e+37
        %v1758 = vand.u32 %v1563, 2147483648
        %v1759 = vor.u32 1.1754944e-38, %v1758
        %v1760 = vsel %vm1757, %v1759, %v1755
        %v1761 = vmul.f32 %v1547, %v1760
        %v1762 = vrcp.pop %v1564
        %v1763 = vmul.f32 %v1564, %v1762
        %v1764 = vsub.f32 1.0, %v1763
        %v1765 = vmul.f32 %v1762, %v1764
        %v1766 = vadd.f32 %v1762, %v1765
        %vm1767 = vweird.f32 %v1564
        %vm1768 = vweird.f32 %v1762
        %vm1769 = vmor %vm1767, %vm1768
        %v1770 = vsel %vm1769, %v1762, %v1766
        %v1771 = vand.u32 2147483647, %v1564
        %vm1772 = vcmp.eq.f32.partialorder %v1771, 8.507059e+37
        %v1773 = vand.u32 %v1564, 2147483648
        %v1774 = vor.u32 1.1754944e-38, %v1773
        %v1775 = vsel %vm1772, %v1774, %v1770
        %v1776 = vmul.f32 %v1548, %v1775
        %v1777 = vrcp.pop %v1565
        %v1778 = vmul.f32 %v1565, %v1777
        %v1779 = vsub.f32 1.0, %v1778
        %v1780 = vmul.f32 %v1777, %v1779
        %v1781 = vadd.f32 %v1777, %v1780
        %vm1782 = vweird.f32 %v1565
        %vm1783 = vweird.f32 %v1777
        %vm1784 = vmor %vm1782, %vm1783
        %v1785 = vsel %vm1784, %v1777, %v1781
        %v1786 = vand.u32 2147483647, %v1565
        %vm1787 = vcmp.eq.f32.partialorder %v1786, 8.507059e+37
        %v1788 = vand.u32 %v1565, 2147483648
        %v1789 = vor.u32 1.1754944e-38, %v1788
        %v1790 = vsel %vm1787, %v1789, %v1785
        %v1791 = vmul.f32 %v1549, %v1790
        %v1792 = vrcp.pop %v1566
        %v1793 = vmul.f32 %v1566, %v1792
        %v1794 = vsub.f32 1.0, %v1793
        %v1795 = vmul.f32 %v1792, %v1794
        %v1796 = vadd.f32 %v1792, %v1795
        %vm1797 = vweird.f32 %v1566
        %vm1798 = vweird.f32 %v1792
        %vm1799 = vmor %vm1797, %vm1798
        %v1800 = vsel %vm1799, %v1792, %v1796
        %v1801 = vand.u32 2147483647, %v1566
        %vm1802 = vcmp.eq.f32.partialorder %v1801, 8.507059e+37
        %v1803 = vand.u32 %v1566, 2147483648
        %v1804 = vor.u32 1.1754944e-38, %v1803
        %v1805 = vsel %vm1802, %v1804, %v1800
        %v1806 = vmul.f32 %v1550, %v1805
        %v1807 = vld [vmem:[%s347] sm:$0xff]
        %v1808 = vld [vmem:[%s347 + $0x8] sm:$0xff]
        %v1809 = vld [vmem:[%s347 + $0x10] sm:$0xff]
        %v1810 = vld [vmem:[%s347 + $0x18] sm:$0xff]
        %v1811 = vld [vmem:[%s347 + $0x20] sm:$0xff]
        %v1812 = vld [vmem:[%s347 + $0x28] sm:$0xff]
        %v1813 = vld [vmem:[%s347 + $0x30] sm:$0xff]
        %v1814 = vld [vmem:[%s347 + $0x38] sm:$0xff]
        %v1815 = vld [vmem:[%s347 + $0x40] sm:$0xff]
        %v1816 = vld [vmem:[%s347 + $0x48] sm:$0xff]
        %v1817 = vld [vmem:[%s347 + $0x50] sm:$0xff]
        %v1818 = vld [vmem:[%s347 + $0x58] sm:$0xff]
        %v1819 = vld [vmem:[%s347 + $0x60] sm:$0xff]
        %v1820 = vld [vmem:[%s347 + $0x68] sm:$0xff]
        %v1821 = vld [vmem:[%s347 + $0x70] sm:$0xff]
        %v1822 = vld [vmem:[%s347 + $0x78] sm:$0xff]
        %vm1823 = vcmp.ge.f32.partialorder %v1807, 0.5
        %vm1824 = vcmp.ge.f32.partialorder %v1808, 0.5
        %vm1825 = vcmp.ge.f32.partialorder %v1809, 0.5
        %vm1826 = vcmp.ge.f32.partialorder %v1810, 0.5
        %vm1827 = vcmp.ge.f32.partialorder %v1811, 0.5
        %vm1828 = vcmp.ge.f32.partialorder %v1812, 0.5
        %vm1829 = vcmp.ge.f32.partialorder %v1813, 0.5
        %vm1830 = vcmp.ge.f32.partialorder %v1814, 0.5
        %vm1831 = vcmp.ge.f32.partialorder %v1815, 0.5
        %vm1832 = vcmp.ge.f32.partialorder %v1816, 0.5
        %vm1833 = vcmp.ge.f32.partialorder %v1817, 0.5
        %vm1834 = vcmp.ge.f32.partialorder %v1818, 0.5
        %vm1835 = vcmp.ge.f32.partialorder %v1819, 0.5
        %vm1836 = vcmp.ge.f32.partialorder %v1820, 0.5
        %vm1837 = vcmp.ge.f32.partialorder %v1821, 0.5
        %vm1838 = vcmp.ge.f32.partialorder %v1822, 0.5
        %v1839 = vsel %vm1823, 1, 0
        %v1840 = vsel %vm1824, 1, 0
        %v1841 = vsel %vm1825, 1, 0
        %v1842 = vsel %vm1826, 1, 0
        %v1843 = vsel %vm1827, 1, 0
        %v1844 = vsel %vm1828, 1, 0
        %v1845 = vsel %vm1829, 1, 0
        %v1846 = vsel %vm1830, 1, 0
        %v1847 = vsel %vm1831, 1, 0
        %v1848 = vsel %vm1832, 1, 0
        %v1849 = vsel %vm1833, 1, 0
        %v1850 = vsel %vm1834, 1, 0
        %v1851 = vsel %vm1835, 1, 0
        %v1852 = vsel %vm1836, 1, 0
        %v1853 = vsel %vm1837, 1, 0
        %v1854 = vsel %vm1838, 1, 0
        %v1855 = vcvt.s32.f32 %v1839
        %v1856 = vcvt.s32.f32 %v1840
        %v1857 = vcvt.s32.f32 %v1841
        %v1858 = vcvt.s32.f32 %v1842
        %v1859 = vcvt.s32.f32 %v1843
        %v1860 = vcvt.s32.f32 %v1844
        %v1861 = vcvt.s32.f32 %v1845
        %v1862 = vcvt.s32.f32 %v1846
        %v1863 = vcvt.s32.f32 %v1847
        %v1864 = vcvt.s32.f32 %v1848
        %v1865 = vcvt.s32.f32 %v1849
        %v1866 = vcvt.s32.f32 %v1850
        %v1867 = vcvt.s32.f32 %v1851
        %v1868 = vcvt.s32.f32 %v1852
        %v1869 = vcvt.s32.f32 %v1853
        %v1870 = vcvt.s32.f32 %v1854
        %v1871 = vsub.f32 0.0, %v1581
        %v1872 = vsub.f32 0.0, %v1596
        %v1873 = vsub.f32 0.0, %v1611
        %v1874 = vsub.f32 0.0, %v1626
        %v1875 = vsub.f32 0.0, %v1641
        %v1876 = vsub.f32 0.0, %v1656
        %v1877 = vsub.f32 0.0, %v1671
        %v1878 = vsub.f32 0.0, %v1686
        %v1879 = vsub.f32 0.0, %v1701
        %v1880 = vsub.f32 0.0, %v1716
        %v1881 = vsub.f32 0.0, %v1731
        %v1882 = vsub.f32 0.0, %v1746
        %v1883 = vsub.f32 0.0, %v1761
        %v1884 = vsub.f32 0.0, %v1776
        %v1885 = vsub.f32 0.0, %v1791
        %v1886 = vsub.f32 0.0, %v1806
        %v1887 = vmul.f32 %v1871, %v1855
        %v1888 = vmul.f32 %v1872, %v1856
        %v1889 = vmul.f32 %v1873, %v1857
        %v1890 = vmul.f32 %v1874, %v1858
        %v1891 = vmul.f32 %v1875, %v1859
        %v1892 = vmul.f32 %v1876, %v1860
        %v1893 = vmul.f32 %v1877, %v1861
        %v1894 = vmul.f32 %v1878, %v1862
        %v1895 = vmul.f32 %v1879, %v1863
        %v1896 = vmul.f32 %v1880, %v1864
        %v1897 = vmul.f32 %v1881, %v1865
        %v1898 = vmul.f32 %v1882, %v1866
        %v1899 = vmul.f32 %v1883, %v1867
        %v1900 = vmul.f32 %v1884, %v1868
        %v1901 = vmul.f32 %v1885, %v1869
        %v1902 = vmul.f32 %v1886, %v1870
        %1903 = vst.msk [vmem:[%s353] sm:$0xff] %vm890, %v1887
        %1904 = vst.msk [vmem:[%s353 + $0x8] sm:$0xff] %vm890, %v1888
        %1905 = vst.msk [vmem:[%s353 + $0x10] sm:$0xff] %vm890, %v1889
        %1906 = vst.msk [vmem:[%s353 + $0x18] sm:$0xff] %vm890, %v1890
        %1907 = vst.msk [vmem:[%s353 + $0x20] sm:$0xff] %vm890, %v1891
        %1908 = vst.msk [vmem:[%s353 + $0x28] sm:$0xff] %vm890, %v1892
        %1909 = vst.msk [vmem:[%s353 + $0x30] sm:$0xff] %vm890, %v1893
        %1910 = vst.msk [vmem:[%s353 + $0x38] sm:$0xff] %vm890, %v1894
        %1911 = vst.msk [vmem:[%s353 + $0x40] sm:$0xff] %vm890, %v1895
        %1912 = vst.msk [vmem:[%s353 + $0x48] sm:$0xff] %vm890, %v1896
        %1913 = vst.msk [vmem:[%s353 + $0x50] sm:$0xff] %vm890, %v1897
        %1914 = vst.msk [vmem:[%s353 + $0x58] sm:$0xff] %vm890, %v1898
        %1915 = vst.msk [vmem:[%s353 + $0x60] sm:$0xff] %vm890, %v1899
        %1916 = vst.msk [vmem:[%s353 + $0x68] sm:$0xff] %vm890, %v1900
        %1917 = vst.msk [vmem:[%s353 + $0x70] sm:$0xff] %vm890, %v1901
        %1918 = vst.msk [vmem:[%s353 + $0x78] sm:$0xff] %vm890, %v1902
        %1919 = vst.msk [vmem:[%s359] sm:$0xff] %vm890, %v1855
        %1920 = vst.msk [vmem:[%s359 + $0x8] sm:$0xff] %vm890, %v1856
        %1921 = vst.msk [vmem:[%s359 + $0x10] sm:$0xff] %vm890, %v1857
        %1922 = vst.msk [vmem:[%s359 + $0x18] sm:$0xff] %vm890, %v1858
        %1923 = vst.msk [vmem:[%s359 + $0x20] sm:$0xff] %vm890, %v1859
        %1924 = vst.msk [vmem:[%s359 + $0x28] sm:$0xff] %vm890, %v1860
        %1925 = vst.msk [vmem:[%s359 + $0x30] sm:$0xff] %vm890, %v1861
        %1926 = vst.msk [vmem:[%s359 + $0x38] sm:$0xff] %vm890, %v1862
        %1927 = vst.msk [vmem:[%s359 + $0x40] sm:$0xff] %vm890, %v1863
        %1928 = vst.msk [vmem:[%s359 + $0x48] sm:$0xff] %vm890, %v1864
        %1929 = vst.msk [vmem:[%s359 + $0x50] sm:$0xff] %vm890, %v1865
        %1930 = vst.msk [vmem:[%s359 + $0x58] sm:$0xff] %vm890, %v1866
        %1931 = vst.msk [vmem:[%s359 + $0x60] sm:$0xff] %vm890, %v1867
        %1932 = vst.msk [vmem:[%s359 + $0x68] sm:$0xff] %vm890, %v1868
        %1933 = vst.msk [vmem:[%s359 + $0x70] sm:$0xff] %vm890, %v1869
        %1934 = vst.msk [vmem:[%s359 + $0x78] sm:$0xff] %vm890, %v1870
      $region48: #{tpu_custom_call.1} parent=39 // pred_fallthru
        _
      %s1935 = smul.u32 16, %s22
      %p1936 = scmp.lt.s32.totalorder %s1935, 31
      %s1937 = scalar_select %p1936, %s1935, 31
      %s1938 = smul.addr %s1937, 8
      %s1939 = scalar_lea.vmem %s5, %s1938
      %s1940 = smul.u32 16, %s22
      %p1941 = scmp.lt.s32.totalorder %s1940, 31
      %s1942 = scalar_select %p1941, %s1940, 31
      %s1943 = smul.addr %s1942, 8
      %s1944 = scalar_lea.vmem %s6, %s1943
      // Predicated region
      $region49: #{tpu_custom_call.1} parent=39 // pred_check
        %p1945 = pneg %p178
      $region50: #{tpu_custom_call.1} parent=39 // pred_check_branch
        %1947 = sbr.rel (%p1945) target = $region52
      $region51: #{tpu_custom_call.1} parent=39 // pred_region
        %s1948 = smul.u32 16, %s22
      $region52: #{tpu_custom_call.1} parent=39 // pred_fallthru
        _
      // Predicated region
      $region53: #{tpu_custom_call.1} parent=39 // pred_check
        %p1949 = pneg %p204
      $region54: #{tpu_custom_call.1} parent=39 // pred_check_branch
        %1951 = sbr.rel (%p1949) target = $region56
      $region55: #{tpu_custom_call.1} parent=39 // pred_region
        %s1952 = smul.u32 16, %s22
      $region56: #{tpu_custom_call.1} parent=39 // pred_fallthru
        _
    $region40: #{tpu_custom_call.1} parent=5 // pred_fallthru
      _
    %p1953 = scmp.le.s32.totalorder 2, %s13
    // Predicated region
    $region57: #{tpu_custom_call.1} parent=5 // pred_check
      %p1954 = pneg %p1953
    $region58: #{tpu_custom_call.1} parent=5 // pred_check_branch
      %1956 = sbr.rel (%p1954) target = $region60
    $region59: #{tpu_custom_call.1} parent=5 // pred_region
      %s1957 = ssub.s32 %s13, 2
      // Predicated region
      $region61: #{tpu_custom_call.1} parent=59 // pred_check
        %p1958 = pneg %p184
      $region62: #{tpu_custom_call.1} parent=59 // pred_check_branch
        %1960 = sbr.rel (%p1958) target = $region64
      $region63: #{tpu_custom_call.1} parent=59 // pred_region
        %s1961 = smul.u32 16, %s24
        %p1962 = scmp.lt.s32.totalorder %s1961, 31
        %s1963 = scalar_select %p1962, %s1961, 31
        %s1964 = smul.addr %s1963, 8
        %s1965 = scalar_lea.vmem %s5, %s1964
      $region64: #{tpu_custom_call.1} parent=59 // pred_fallthru
        _
      // Predicated region
      $region65: #{tpu_custom_call.1} parent=59 // pred_check
        %p1966 = pneg %p210
      $region66: #{tpu_custom_call.1} parent=59 // pred_check_branch
        %1968 = sbr.rel (%p1966) target = $region68
      $region67: #{tpu_custom_call.1} parent=59 // pred_region
        %s1969 = smul.u32 16, %s24
        %p1970 = scmp.lt.s32.totalorder %s1969, 31
        %s1971 = scalar_select %p1970, %s1969, 31
        %s1972 = smul.addr %s1971, 8
        %s1973 = scalar_lea.vmem %s6, %s1972
      $region68: #{tpu_custom_call.1} parent=59 // pred_fallthru
        _
    $region60: #{tpu_custom_call.1} parent=5 // pred_fallthru
      _
  $region6: #{tpu_custom_call.1} parent=0 // loop_footer
    %s17 = sadd.s32 1, %s13
  $region7: #{tpu_custom_call.1} parent=0 // loop_footer_branch
    %12 = sbr.rel target = $region3
  $region8: #{tpu_custom_call.1} parent=0 // loop_exit
    _

</llo_original>
